<compile_context>
chip_gen: v7x
topology: tpu7x:2x2x1
jax: 0.10.0
libtpu: 0.0.40
codegen_flags: <defaults>
</compile_context>

<pallas_src>
import functools
import math

import jax
import jax.numpy as jnp
from jax.experimental import pallas as pl
from jax.experimental.pallas import tpu as pltpu


def _round_up(x, m):
    return ((x + m - 1) // m) * m


# ----------------------------- Pallas kernel ---------------------------------
def model_kernel(seq_ref, tgt_ref, mask_ref,
                 wih_e_ref, whh_e_ref, be_ref,
                 wih_d_ref, whh_d_ref, bd_ref,
                 wout_ref, bout_ref,
                 loss_ref, h_scr, *, T, B):
    """One batch block.

    seq_ref / tgt_ref : (T*B, V)  t-major one-hot slabs for this batch block
    mask_ref          : (T*B, 1)  batch-valid mask (identical for every t)
    h_scr             : VMEM ((T-1)*B, H) scratch for the decoder hidden states
    loss_ref          : (1, 8, 128) lane-dense partial-loss output tile
    """
    H = whh_e_ref.shape[0]

    whh_e = whh_e_ref[...]
    whh_d = whh_d_ref[...]

    seq = seq_ref[...]                                   # (T*B, V)
    tgt = tgt_ref[...]                                   # (T*B, V)
    mask = mask_ref[...]                                 # (T*B, 1)

    # Hoisted one-hot input projections, biases folded in (single broadcast each):
    #   encoder consumes sequence[T-1 .. 1]  -> slab rows [B, T*B)
    #   decoder consumes sequence[0 .. T-2]  -> slab rows [0, (T-1)*B)
    xe = (jnp.dot(seq[B:, :], wih_e_ref[...], preferred_element_type=jnp.float32)
          + be_ref[...])                                 # ((T-1)*B, 4H)
    xd = (jnp.dot(seq[:(T - 1) * B, :], wih_d_ref[...], preferred_element_type=jnp.float32)
          + bd_ref[...])                                 # ((T-1)*B, 4H)

    def cell(x_proj, h, c, whh):
        # gates = (x@W_ih + b, precomputed) + h@W_hh; PyTorch gate order i,f,g,o
        gates = x_proj + jnp.dot(h, whh, preferred_element_type=jnp.float32)
        sig = jax.nn.sigmoid(gates)                      # one full-4H-wide EUP pass (i,f,o)
        th = jnp.tanh(gates)                             # one full-4H-wide EUP pass (g)
        i = sig[:, 0 * H:1 * H]
        f = sig[:, 1 * H:2 * H]
        g = th[:, 2 * H:3 * H]
        o = sig[:, 3 * H:4 * H]
        c_new = f * c + i * g
        h_new = o * jnp.tanh(c_new)
        return h_new, c_new

    h = jnp.zeros((B, H), jnp.float32)
    c = jnp.zeros((B, H), jnp.float32)

    # ---- encoder: consume sequence[T-1 .. 1]; fully unrolled (T static & small) ----
    for t in range(T - 1, 0, -1):
        h, c = cell(xe[(t - 1) * B:t * B], h, c, whh_e)

    # ---- decoder with teacher forcing: inputs sequence[0 .. T-2]; h -> scratch slab ----
    # TODO(synk): original model samples teacher forcing with p=0.9 per step; this
    # implements deterministic full teacher forcing (the dominant path).
    for t in range(1, T):
        h, c = cell(xd[(t - 1) * B:t * B], h, c, whh_d)
        h_scr[pl.ds((t - 1) * B, B), :] = h

    # ---- batched output projection + masked cross-entropy (out of the loop) ----
    logits_dec = (jnp.dot(h_scr[...], wout_ref[...], preferred_element_type=jnp.float32)
                  + bout_ref[...])                       # ((T-1)*B, V), rows t = 1..T-1
    tgt_dec = tgt[B:, :]
    m = jnp.max(logits_dec, axis=-1, keepdims=True)
    lse = m + jnp.log(jnp.sum(jnp.exp(logits_dec - m), axis=-1, keepdims=True))
    ll = jnp.sum(logits_dec * tgt_dec, axis=-1, keepdims=True)
    total_dec = jnp.sum((lse - ll) * mask[B:, :])

    # t = 0 term: "logits" are the raw one-hot decoder input (sequence[0])
    logits0 = seq[:B, :]
    tgt0 = tgt[:B, :]
    m0 = jnp.max(logits0, axis=-1, keepdims=True)
    lse0 = m0 + jnp.log(jnp.sum(jnp.exp(logits0 - m0), axis=-1, keepdims=True))
    ll0 = jnp.sum(logits0 * tgt0, axis=-1, keepdims=True)
    total0 = jnp.sum((lse0 - ll0) * mask[:B, :])

    # broadcast the partial sum across the (8,128) lane-dense output tile;
    # the wrapper reads [i, 0, 0]
    loss_ref[...] = jnp.full(loss_ref.shape, total_dec + total0, dtype=jnp.float32)


# ------------------------------- wrapper --------------------------------------
def model_forward(sequence, targets, params, *, max_block_b=128):
    """sequence: (T, B, V) f32 one-hot; targets: (T, B) int32. Returns scalar loss."""
    T, B, V = sequence.shape
    assert T >= 2
    H = params["whh_e"].shape[0]

    # Batch blocking: take the whole (8-padded) batch when it fits under max_block_b,
    # otherwise cap at max_block_b. On v7x pick max_block_b so nb >= 2 (both TCs used).
    block_b = min(max_block_b, _round_up(B, 8))
    B_pad = _round_up(B, block_b)
    nb = B_pad // block_b
    pad = B_pad - B

    tgt_onehot = jax.nn.one_hot(targets, V, dtype=jnp.float32)
    if pad:
        sequence = jnp.pad(sequence, ((0, 0), (0, pad), (0, 0)))
        tgt_onehot = jnp.pad(tgt_onehot, ((0, 0), (0, pad), (0, 0)))

    # Flatten / regroup on the XLA side (free relative to the kernel):
    # (T, B_pad, D) -> (nb, T*block_b, D), batch-block major, t-major inside a block.
    def to_blocks(a):
        d = a.shape[-1]
        a = a.reshape(T, nb, block_b, d)
        a = jnp.transpose(a, (1, 0, 2, 3))
        return a.reshape(nb, T * block_b, d)

    seq_blocks = to_blocks(sequence)
    tgt_blocks = to_blocks(tgt_onehot)
    valid = (jnp.arange(B_pad) < B).astype(jnp.float32).reshape(1, B_pad, 1)
    mask_blocks = to_blocks(jnp.broadcast_to(valid, (T, B_pad, 1)))

    weights = (params["wih_e"], params["whh_e"], params["b_e"],
               params["wih_d"], params["whh_d"], params["b_d"],
               params["wout"], params["bout"])

    def full_spec(a):
        return pl.BlockSpec(a.shape, lambda i: (0, 0))

    in_specs = ([pl.BlockSpec((None, T * block_b, V), lambda i: (i, 0, 0)),   # sequence slab
                 pl.BlockSpec((None, T * block_b, V), lambda i: (i, 0, 0)),   # target one-hot slab
                 pl.BlockSpec((None, T * block_b, 1), lambda i: (i, 0, 0))]   # batch-valid mask
                + [full_spec(w) for w in weights])

    kernel = functools.partial(model_kernel, T=T, B=block_b)

    partial = pl.pallas_call(
        kernel,
        out_shape=jax.ShapeDtypeStruct((nb, 8, 128), jnp.float32),
        grid=(nb,),
        in_specs=in_specs,
        out_specs=pl.BlockSpec((1, 8, 128), lambda i: (i, 0, 0)),
        scratch_shapes=[pltpu.VMEM(((T - 1) * block_b, H), jnp.float32)],
        compiler_params=pltpu.CompilerParams(
            dimension_semantics=("parallel",)),     # batch blocks shard across TCs on v7x
    )(seq_blocks, tgt_blocks, mask_blocks, *weights)

    # every batch row has seq_len == T -> normalize by B*T
    return jnp.sum(partial[:, 0, 0]) / jnp.float32(B * T)


# ------------------------- deterministic parameter init -----------------------
def init_params(key, V, H):
    bound = 1.0 / math.sqrt(H)
    ks = jax.random.split(key, 12)

    def u(k, shape):
        return jax.random.uniform(k, shape, jnp.float32, -bound, bound)

    return dict(
        # encoder LSTM (weights stored pre-transposed: x @ W_ih, h @ W_hh)
        wih_e=u(ks[0], (V, 4 * H)),
        whh_e=u(ks[1], (H, 4 * H)),
        b_e=u(ks[2], (1, 4 * H)) + u(ks[3], (1, 4 * H)),   # b_ih + b_hh
        # decoder LSTM
        wih_d=u(ks[4], (V, 4 * H)),
        whh_d=u(ks[5], (H, 4 * H)),
        b_d=u(ks[6], (1, 4 * H)) + u(ks[7], (1, 4 * H)),
        # decoder output Linear
        wout=u(ks[8], (H, V)),
        bout=u(ks[9], (1, V)),
    )


# ----------------------------- pure-JAX reference -----------------------------
def reference_loss(sequence, targets, params):
    T, B, V = sequence.shape
    H = params["whh_e"].shape[0]

    def lstm_step(x, h, c, wih, whh, b):
        gates = x @ wih + h @ whh + b
        i, f, g, o = jnp.split(gates, 4, axis=-1)
        c = jax.nn.sigmoid(f) * c + jax.nn.sigmoid(i) * jnp.tanh(g)
        h = jax.nn.sigmoid(o) * jnp.tanh(c)
        return h, c

    h = jnp.zeros((B, H), jnp.float32)
    c = jnp.zeros((B, H), jnp.float32)
    for t in range(T - 1, 0, -1):
        h, c = lstm_step(sequence[t], h, c, params["wih_e"], params["whh_e"], params["b_e"])

    outs = [sequence[0]]
    x = sequence[0]
    for t in range(1, T):
        h, c = lstm_step(x, h, c, params["wih_d"], params["whh_d"], params["b_d"])
        outs.append(h @ params["wout"] + params["bout"])
        x = sequence[t]
    outs = jnp.stack(outs)                                  # (T, B, V)
    logp = jax.nn.log_softmax(outs, axis=-1)
    losses = -jnp.sum(logp * jax.nn.one_hot(targets, V, dtype=jnp.float32), axis=-1)
    return jnp.sum(losses) / (B * T)


# ----------------------------------- main --------------------------------------
if __name__ == "__main__":
    T, V, H = 8, 32, 32   # seq_len, vocabulary_size, encoding_size (small test sizes)

    key = jax.random.PRNGKey(0)
    k_tok, k_par, k_tok2, k_tok3 = jax.random.split(key, 4)
    params = init_params(k_par, V, H)

    # check 1: batch = 8 (single block, full sublane utilization)
    B = 8
    tokens = jax.random.randint(k_tok, (T, B), 0, V, dtype=jnp.int32)   # numbered_seq
    sequence = jax.nn.one_hot(tokens, V, dtype=jnp.float32)             # (T, B, V)
    loss = model_forward(sequence, tokens, params)
    jax.block_until_ready(loss)
    ref = reference_loss(sequence, tokens, params)
    jax.block_until_ready(ref)
    assert jnp.allclose(loss, ref, rtol=1e-4, atol=1e-4), (loss, ref)

    # check 2: batch = 4 (padding + mask inside one block)
    B2 = 4
    tokens2 = jax.random.randint(k_tok2, (T, B2), 0, V, dtype=jnp.int32)
    sequence2 = jax.nn.one_hot(tokens2, V, dtype=jnp.float32)
    loss2 = model_forward(sequence2, tokens2, params)
    jax.block_until_ready(loss2)
    ref2 = reference_loss(sequence2, tokens2, params)
    jax.block_until_ready(ref2)
    assert jnp.allclose(loss2, ref2, rtol=1e-4, atol=1e-4), (loss2, ref2)

    # check 3: batch = 20; (a) single 24-row block, (b) forced multi-block grid path
    B3 = 20
    tokens3 = jax.random.randint(k_tok3, (T, B3), 0, V, dtype=jnp.int32)
    sequence3 = jax.nn.one_hot(tokens3, V, dtype=jnp.float32)
    ref3 = reference_loss(sequence3, tokens3, params)
    jax.block_until_ready(ref3)
    loss3a = model_forward(sequence3, tokens3, params)              # block_b = 24, nb = 1
    jax.block_until_ready(loss3a)
    assert jnp.allclose(loss3a, ref3, rtol=1e-4, atol=1e-4), (loss3a, ref3)
    loss3b = model_forward(sequence3, tokens3, params, max_block_b=8)   # nb = 3, padded tail block
    jax.block_until_ready(loss3b)
    assert jnp.allclose(loss3b, ref3, rtol=1e-4, atol=1e-4), (loss3b, ref3)

    print("KERNEL_OK")
</pallas_src>

<mosaic_0001>
module attributes {stable_mosaic.version = 11 : i64} {
  func.func @model_kernel(%arg0: i32, %arg1: memref<1x64x32xf32, #tpu.memory_space<vmem>>, %arg2: memref<1x64x32xf32, #tpu.memory_space<vmem>>, %arg3: memref<1x64x1xf32, #tpu.memory_space<vmem>>, %arg4: memref<32x128xf32, #tpu.memory_space<vmem>>, %arg5: memref<32x128xf32, #tpu.memory_space<vmem>>, %arg6: memref<1x128xf32, #tpu.memory_space<vmem>>, %arg7: memref<32x128xf32, #tpu.memory_space<vmem>>, %arg8: memref<32x128xf32, #tpu.memory_space<vmem>>, %arg9: memref<1x128xf32, #tpu.memory_space<vmem>>, %arg10: memref<32x32xf32, #tpu.memory_space<vmem>>, %arg11: memref<1x32xf32, #tpu.memory_space<vmem>>, %arg12: memref<1x8x128xf32, #tpu.memory_space<vmem>>, %arg13: memref<56x32xf32, #tpu.memory_space<vmem>>) attributes {dimension_semantics = [#tpu.dimension_semantics<parallel>], iteration_bounds = array<i64: 1>, scalar_prefetch = 0 : i64, scratch_operands = 1 : i64, tpu.core_type = #tpu.core_type<tc>, window_params = [{transform_indices = @transform_0, window_bounds = array<i64: 1, 64, 32>}, {transform_indices = @transform_1, window_bounds = array<i64: 1, 64, 32>}, {transform_indices = @transform_2, window_bounds = array<i64: 1, 64, 1>}, {pipeline_mode = #tpu.pipeline_mode<synchronous>, transform_indices = @transform_3, window_bounds = array<i64: 32, 128>}, {pipeline_mode = #tpu.pipeline_mode<synchronous>, transform_indices = @transform_4, window_bounds = array<i64: 32, 128>}, {pipeline_mode = #tpu.pipeline_mode<synchronous>, transform_indices = @transform_5, window_bounds = array<i64: 1, 128>}, {pipeline_mode = #tpu.pipeline_mode<synchronous>, transform_indices = @transform_6, window_bounds = array<i64: 32, 128>}, {pipeline_mode = #tpu.pipeline_mode<synchronous>, transform_indices = @transform_7, window_bounds = array<i64: 32, 128>}, {pipeline_mode = #tpu.pipeline_mode<synchronous>, transform_indices = @transform_8, window_bounds = array<i64: 1, 128>}, {pipeline_mode = #tpu.pipeline_mode<synchronous>, transform_indices = @transform_9, window_bounds = array<i64: 32, 32>}, {pipeline_mode = #tpu.pipeline_mode<synchronous>, transform_indices = @transform_10, window_bounds = array<i64: 1, 32>}, {transform_indices = @transform_11, window_bounds = array<i64: 1, 8, 128>}]} {
    %c0 = arith.constant 0 : index
    %c0_0 = arith.constant 0 : index
    %0 = vector.load %arg5[%c0, %c0_0] : memref<32x128xf32, #tpu.memory_space<vmem>>, vector<32x128xf32>
    %c0_1 = arith.constant 0 : index
    %c0_2 = arith.constant 0 : index
    %1 = vector.load %arg8[%c0_1, %c0_2] : memref<32x128xf32, #tpu.memory_space<vmem>>, vector<32x128xf32>
    %c0_3 = arith.constant 0 : index
    %c0_4 = arith.constant 0 : index
    %c0_5 = arith.constant 0 : index
    %2 = vector.load %arg1[%c0_3, %c0_4, %c0_5] : memref<1x64x32xf32, #tpu.memory_space<vmem>>, vector<1x64x32xf32>
    %3 = vector.shape_cast %2 : vector<1x64x32xf32> to vector<64x32xf32>
    %c0_6 = arith.constant 0 : index
    %c0_7 = arith.constant 0 : index
    %c0_8 = arith.constant 0 : index
    %4 = vector.load %arg2[%c0_6, %c0_7, %c0_8] : memref<1x64x32xf32, #tpu.memory_space<vmem>>, vector<1x64x32xf32>
    %5 = vector.shape_cast %4 : vector<1x64x32xf32> to vector<64x32xf32>
    %c0_9 = arith.constant 0 : index
    %c0_10 = arith.constant 0 : index
    %c0_11 = arith.constant 0 : index
    %6 = vector.load %arg3[%c0_9, %c0_10, %c0_11] : memref<1x64x1xf32, #tpu.memory_space<vmem>>, vector<1x64x1xf32>
    %7 = vector.shape_cast %6 : vector<1x64x1xf32> to vector<64x1xf32>
    %8 = vector.extract_strided_slice %3 {offsets = [8, 0], sizes = [56, 32], strides = [1, 1]} : vector<64x32xf32> to vector<56x32xf32>
    %c0_12 = arith.constant 0 : index
    %c0_13 = arith.constant 0 : index
    %9 = vector.load %arg4[%c0_12, %c0_13] : memref<32x128xf32, #tpu.memory_space<vmem>>, vector<32x128xf32>
    %cst = arith.constant dense<0.000000e+00> : vector<56x128xf32>
    %10 = tpu.matmul %8, %9, %cst {dimension_numbers = #tpu.dot_dimension_numbers<[1], [0], [0], [1], [0, 0, 1, 1], [], []>} : vector<56x32xf32>, vector<32x128xf32>, vector<56x128xf32> -> vector<56x128xf32>
    %c0_14 = arith.constant 0 : index
    %c0_15 = arith.constant 0 : index
    %11 = vector.load %arg6[%c0_14, %c0_15] : memref<1x128xf32, #tpu.memory_space<vmem>>, vector<1x128xf32>
    %12 = vector.broadcast %11 : vector<1x128xf32> to vector<56x128xf32>
    %13 = arith.addf %10, %12 : vector<56x128xf32>
    %14 = vector.extract_strided_slice %3 {offsets = [0, 0], sizes = [56, 32], strides = [1, 1]} : vector<64x32xf32> to vector<56x32xf32>
    %c0_16 = arith.constant 0 : index
    %c0_17 = arith.constant 0 : index
    %15 = vector.load %arg7[%c0_16, %c0_17] : memref<32x128xf32, #tpu.memory_space<vmem>>, vector<32x128xf32>
    %cst_18 = arith.constant dense<0.000000e+00> : vector<56x128xf32>
    %16 = tpu.matmul %14, %15, %cst_18 {dimension_numbers = #tpu.dot_dimension_numbers<[1], [0], [0], [1], [0, 0, 1, 1], [], []>} : vector<56x32xf32>, vector<32x128xf32>, vector<56x128xf32> -> vector<56x128xf32>
    %c0_19 = arith.constant 0 : index
    %c0_20 = arith.constant 0 : index
    %17 = vector.load %arg9[%c0_19, %c0_20] : memref<1x128xf32, #tpu.memory_space<vmem>>, vector<1x128xf32>
    %18 = vector.broadcast %17 : vector<1x128xf32> to vector<56x128xf32>
    %19 = arith.addf %16, %18 : vector<56x128xf32>
    %cst_21 = arith.constant 0.000000e+00 : f32
    %20 = vector.broadcast %cst_21 : f32 to vector<8x32xf32>
    %cst_22 = arith.constant 0.000000e+00 : f32
    %21 = vector.broadcast %cst_22 : f32 to vector<8x32xf32>
    %22 = vector.extract_strided_slice %13 {offsets = [48, 0], sizes = [8, 128], strides = [1, 1]} : vector<56x128xf32> to vector<8x128xf32>
    %cst_23 = arith.constant dense<0.000000e+00> : vector<8x128xf32>
    %23 = tpu.matmul %20, %0, %cst_23 {dimension_numbers = #tpu.dot_dimension_numbers<[1], [0], [0], [1], [0, 0, 1, 1], [], []>} : vector<8x32xf32>, vector<32x128xf32>, vector<8x128xf32> -> vector<8x128xf32>
    %24 = arith.addf %22, %23 : vector<8x128xf32>
    %25 = arith.negf %24 : vector<8x128xf32>
    %26 = math.exp %25 : vector<8x128xf32>
    %cst_24 = arith.constant 1.000000e+00 : f32
    %27 = vector.broadcast %cst_24 : f32 to vector<8x128xf32>
    %28 = arith.addf %27, %26 : vector<8x128xf32>
    %29 = arith.divf %27, %28 : vector<8x128xf32>
    %30 = math.tanh %24 : vector<8x128xf32>
    %31 = vector.extract_strided_slice %29 {offsets = [0, 0], sizes = [8, 32], strides = [1, 1]} : vector<8x128xf32> to vector<8x32xf32>
    %32 = vector.extract_strided_slice %29 {offsets = [0, 32], sizes = [8, 32], strides = [1, 1]} : vector<8x128xf32> to vector<8x32xf32>
    %33 = vector.extract_strided_slice %30 {offsets = [0, 64], sizes = [8, 32], strides = [1, 1]} : vector<8x128xf32> to vector<8x32xf32>
    %34 = vector.extract_strided_slice %29 {offsets = [0, 96], sizes = [8, 32], strides = [1, 1]} : vector<8x128xf32> to vector<8x32xf32>
    %35 = arith.mulf %32, %21 : vector<8x32xf32>
    %36 = arith.mulf %31, %33 : vector<8x32xf32>
    %37 = arith.addf %35, %36 : vector<8x32xf32>
    %38 = math.tanh %37 : vector<8x32xf32>
    %39 = arith.mulf %34, %38 : vector<8x32xf32>
    %40 = vector.extract_strided_slice %13 {offsets = [40, 0], sizes = [8, 128], strides = [1, 1]} : vector<56x128xf32> to vector<8x128xf32>
    %cst_25 = arith.constant dense<0.000000e+00> : vector<8x128xf32>
    %41 = tpu.matmul %39, %0, %cst_25 {dimension_numbers = #tpu.dot_dimension_numbers<[1], [0], [0], [1], [0, 0, 1, 1], [], []>} : vector<8x32xf32>, vector<32x128xf32>, vector<8x128xf32> -> vector<8x128xf32>
    %42 = arith.addf %40, %41 : vector<8x128xf32>
    %43 = arith.negf %42 : vector<8x128xf32>
    %44 = math.exp %43 : vector<8x128xf32>
    %cst_26 = arith.constant 1.000000e+00 : f32
    %45 = vector.broadcast %cst_26 : f32 to vector<8x128xf32>
    %46 = arith.addf %45, %44 : vector<8x128xf32>
    %47 = arith.divf %45, %46 : vector<8x128xf32>
    %48 = math.tanh %42 : vector<8x128xf32>
    %49 = vector.extract_strided_slice %47 {offsets = [0, 0], sizes = [8, 32], strides = [1, 1]} : vector<8x128xf32> to vector<8x32xf32>
    %50 = vector.extract_strided_slice %47 {offsets = [0, 32], sizes = [8, 32], strides = [1, 1]} : vector<8x128xf32> to vector<8x32xf32>
    %51 = vector.extract_strided_slice %48 {offsets = [0, 64], sizes = [8, 32], strides = [1, 1]} : vector<8x128xf32> to vector<8x32xf32>
    %52 = vector.extract_strided_slice %47 {offsets = [0, 96], sizes = [8, 32], strides = [1, 1]} : vector<8x128xf32> to vector<8x32xf32>
    %53 = arith.mulf %50, %37 : vector<8x32xf32>
    %54 = arith.mulf %49, %51 : vector<8x32xf32>
    %55 = arith.addf %53, %54 : vector<8x32xf32>
    %56 = math.tanh %55 : vector<8x32xf32>
    %57 = arith.mulf %52, %56 : vector<8x32xf32>
    %58 = vector.extract_strided_slice %13 {offsets = [32, 0], sizes = [8, 128], strides = [1, 1]} : vector<56x128xf32> to vector<8x128xf32>
    %cst_27 = arith.constant dense<0.000000e+00> : vector<8x128xf32>
    %59 = tpu.matmul %57, %0, %cst_27 {dimension_numbers = #tpu.dot_dimension_numbers<[1], [0], [0], [1], [0, 0, 1, 1], [], []>} : vector<8x32xf32>, vector<32x128xf32>, vector<8x128xf32> -> vector<8x128xf32>
    %60 = arith.addf %58, %59 : vector<8x128xf32>
    %61 = arith.negf %60 : vector<8x128xf32>
    %62 = math.exp %61 : vector<8x128xf32>
    %cst_28 = arith.constant 1.000000e+00 : f32
    %63 = vector.broadcast %cst_28 : f32 to vector<8x128xf32>
    %64 = arith.addf %63, %62 : vector<8x128xf32>
    %65 = arith.divf %63, %64 : vector<8x128xf32>
    %66 = math.tanh %60 : vector<8x128xf32>
    %67 = vector.extract_strided_slice %65 {offsets = [0, 0], sizes = [8, 32], strides = [1, 1]} : vector<8x128xf32> to vector<8x32xf32>
    %68 = vector.extract_strided_slice %65 {offsets = [0, 32], sizes = [8, 32], strides = [1, 1]} : vector<8x128xf32> to vector<8x32xf32>
    %69 = vector.extract_strided_slice %66 {offsets = [0, 64], sizes = [8, 32], strides = [1, 1]} : vector<8x128xf32> to vector<8x32xf32>
    %70 = vector.extract_strided_slice %65 {offsets = [0, 96], sizes = [8, 32], strides = [1, 1]} : vector<8x128xf32> to vector<8x32xf32>
    %71 = arith.mulf %68, %55 : vector<8x32xf32>
    %72 = arith.mulf %67, %69 : vector<8x32xf32>
    %73 = arith.addf %71, %72 : vector<8x32xf32>
    %74 = math.tanh %73 : vector<8x32xf32>
    %75 = arith.mulf %70, %74 : vector<8x32xf32>
    %76 = vector.extract_strided_slice %13 {offsets = [24, 0], sizes = [8, 128], strides = [1, 1]} : vector<56x128xf32> to vector<8x128xf32>
    %cst_29 = arith.constant dense<0.000000e+00> : vector<8x128xf32>
    %77 = tpu.matmul %75, %0, %cst_29 {dimension_numbers = #tpu.dot_dimension_numbers<[1], [0], [0], [1], [0, 0, 1, 1], [], []>} : vector<8x32xf32>, vector<32x128xf32>, vector<8x128xf32> -> vector<8x128xf32>
    %78 = arith.addf %76, %77 : vector<8x128xf32>
    %79 = arith.negf %78 : vector<8x128xf32>
    %80 = math.exp %79 : vector<8x128xf32>
    %cst_30 = arith.constant 1.000000e+00 : f32
    %81 = vector.broadcast %cst_30 : f32 to vector<8x128xf32>
    %82 = arith.addf %81, %80 : vector<8x128xf32>
    %83 = arith.divf %81, %82 : vector<8x128xf32>
    %84 = math.tanh %78 : vector<8x128xf32>
    %85 = vector.extract_strided_slice %83 {offsets = [0, 0], sizes = [8, 32], strides = [1, 1]} : vector<8x128xf32> to vector<8x32xf32>
    %86 = vector.extract_strided_slice %83 {offsets = [0, 32], sizes = [8, 32], strides = [1, 1]} : vector<8x128xf32> to vector<8x32xf32>
    %87 = vector.extract_strided_slice %84 {offsets = [0, 64], sizes = [8, 32], strides = [1, 1]} : vector<8x128xf32> to vector<8x32xf32>
    %88 = vector.extract_strided_slice %83 {offsets = [0, 96], sizes = [8, 32], strides = [1, 1]} : vector<8x128xf32> to vector<8x32xf32>
    %89 = arith.mulf %86, %73 : vector<8x32xf32>
    %90 = arith.mulf %85, %87 : vector<8x32xf32>
    %91 = arith.addf %89, %90 : vector<8x32xf32>
    %92 = math.tanh %91 : vector<8x32xf32>
    %93 = arith.mulf %88, %92 : vector<8x32xf32>
    %94 = vector.extract_strided_slice %13 {offsets = [16, 0], sizes = [8, 128], strides = [1, 1]} : vector<56x128xf32> to vector<8x128xf32>
    %cst_31 = arith.constant dense<0.000000e+00> : vector<8x128xf32>
    %95 = tpu.matmul %93, %0, %cst_31 {dimension_numbers = #tpu.dot_dimension_numbers<[1], [0], [0], [1], [0, 0, 1, 1], [], []>} : vector<8x32xf32>, vector<32x128xf32>, vector<8x128xf32> -> vector<8x128xf32>
    %96 = arith.addf %94, %95 : vector<8x128xf32>
    %97 = arith.negf %96 : vector<8x128xf32>
    %98 = math.exp %97 : vector<8x128xf32>
    %cst_32 = arith.constant 1.000000e+00 : f32
    %99 = vector.broadcast %cst_32 : f32 to vector<8x128xf32>
    %100 = arith.addf %99, %98 : vector<8x128xf32>
    %101 = arith.divf %99, %100 : vector<8x128xf32>
    %102 = math.tanh %96 : vector<8x128xf32>
    %103 = vector.extract_strided_slice %101 {offsets = [0, 0], sizes = [8, 32], strides = [1, 1]} : vector<8x128xf32> to vector<8x32xf32>
    %104 = vector.extract_strided_slice %101 {offsets = [0, 32], sizes = [8, 32], strides = [1, 1]} : vector<8x128xf32> to vector<8x32xf32>
    %105 = vector.extract_strided_slice %102 {offsets = [0, 64], sizes = [8, 32], strides = [1, 1]} : vector<8x128xf32> to vector<8x32xf32>
    %106 = vector.extract_strided_slice %101 {offsets = [0, 96], sizes = [8, 32], strides = [1, 1]} : vector<8x128xf32> to vector<8x32xf32>
    %107 = arith.mulf %104, %91 : vector<8x32xf32>
    %108 = arith.mulf %103, %105 : vector<8x32xf32>
    %109 = arith.addf %107, %108 : vector<8x32xf32>
    %110 = math.tanh %109 : vector<8x32xf32>
    %111 = arith.mulf %106, %110 : vector<8x32xf32>
    %112 = vector.extract_strided_slice %13 {offsets = [8, 0], sizes = [8, 128], strides = [1, 1]} : vector<56x128xf32> to vector<8x128xf32>
    %cst_33 = arith.constant dense<0.000000e+00> : vector<8x128xf32>
    %113 = tpu.matmul %111, %0, %cst_33 {dimension_numbers = #tpu.dot_dimension_numbers<[1], [0], [0], [1], [0, 0, 1, 1], [], []>} : vector<8x32xf32>, vector<32x128xf32>, vector<8x128xf32> -> vector<8x128xf32>
    %114 = arith.addf %112, %113 : vector<8x128xf32>
    %115 = arith.negf %114 : vector<8x128xf32>
    %116 = math.exp %115 : vector<8x128xf32>
    %cst_34 = arith.constant 1.000000e+00 : f32
    %117 = vector.broadcast %cst_34 : f32 to vector<8x128xf32>
    %118 = arith.addf %117, %116 : vector<8x128xf32>
    %119 = arith.divf %117, %118 : vector<8x128xf32>
    %120 = math.tanh %114 : vector<8x128xf32>
    %121 = vector.extract_strided_slice %119 {offsets = [0, 0], sizes = [8, 32], strides = [1, 1]} : vector<8x128xf32> to vector<8x32xf32>
    %122 = vector.extract_strided_slice %119 {offsets = [0, 32], sizes = [8, 32], strides = [1, 1]} : vector<8x128xf32> to vector<8x32xf32>
    %123 = vector.extract_strided_slice %120 {offsets = [0, 64], sizes = [8, 32], strides = [1, 1]} : vector<8x128xf32> to vector<8x32xf32>
    %124 = vector.extract_strided_slice %119 {offsets = [0, 96], sizes = [8, 32], strides = [1, 1]} : vector<8x128xf32> to vector<8x32xf32>
    %125 = arith.mulf %122, %109 : vector<8x32xf32>
    %126 = arith.mulf %121, %123 : vector<8x32xf32>
    %127 = arith.addf %125, %126 : vector<8x32xf32>
    %128 = math.tanh %127 : vector<8x32xf32>
    %129 = arith.mulf %124, %128 : vector<8x32xf32>
    %130 = vector.extract_strided_slice %13 {offsets = [0, 0], sizes = [8, 128], strides = [1, 1]} : vector<56x128xf32> to vector<8x128xf32>
    %cst_35 = arith.constant dense<0.000000e+00> : vector<8x128xf32>
    %131 = tpu.matmul %129, %0, %cst_35 {dimension_numbers = #tpu.dot_dimension_numbers<[1], [0], [0], [1], [0, 0, 1, 1], [], []>} : vector<8x32xf32>, vector<32x128xf32>, vector<8x128xf32> -> vector<8x128xf32>
    %132 = arith.addf %130, %131 : vector<8x128xf32>
    %133 = arith.negf %132 : vector<8x128xf32>
    %134 = math.exp %133 : vector<8x128xf32>
    %cst_36 = arith.constant 1.000000e+00 : f32
    %135 = vector.broadcast %cst_36 : f32 to vector<8x128xf32>
    %136 = arith.addf %135, %134 : vector<8x128xf32>
    %137 = arith.divf %135, %136 : vector<8x128xf32>
    %138 = math.tanh %132 : vector<8x128xf32>
    %139 = vector.extract_strided_slice %137 {offsets = [0, 0], sizes = [8, 32], strides = [1, 1]} : vector<8x128xf32> to vector<8x32xf32>
    %140 = vector.extract_strided_slice %137 {offsets = [0, 32], sizes = [8, 32], strides = [1, 1]} : vector<8x128xf32> to vector<8x32xf32>
    %141 = vector.extract_strided_slice %138 {offsets = [0, 64], sizes = [8, 32], strides = [1, 1]} : vector<8x128xf32> to vector<8x32xf32>
    %142 = vector.extract_strided_slice %137 {offsets = [0, 96], sizes = [8, 32], strides = [1, 1]} : vector<8x128xf32> to vector<8x32xf32>
    %143 = arith.mulf %140, %127 : vector<8x32xf32>
    %144 = arith.mulf %139, %141 : vector<8x32xf32>
    %145 = arith.addf %143, %144 : vector<8x32xf32>
    %146 = math.tanh %145 : vector<8x32xf32>
    %147 = arith.mulf %142, %146 : vector<8x32xf32>
    %148 = vector.extract_strided_slice %19 {offsets = [0, 0], sizes = [8, 128], strides = [1, 1]} : vector<56x128xf32> to vector<8x128xf32>
    %cst_37 = arith.constant dense<0.000000e+00> : vector<8x128xf32>
    %149 = tpu.matmul %147, %1, %cst_37 {dimension_numbers = #tpu.dot_dimension_numbers<[1], [0], [0], [1], [0, 0, 1, 1], [], []>} : vector<8x32xf32>, vector<32x128xf32>, vector<8x128xf32> -> vector<8x128xf32>
    %150 = arith.addf %148, %149 : vector<8x128xf32>
    %151 = arith.negf %150 : vector<8x128xf32>
    %152 = math.exp %151 : vector<8x128xf32>
    %cst_38 = arith.constant 1.000000e+00 : f32
    %153 = vector.broadcast %cst_38 : f32 to vector<8x128xf32>
    %154 = arith.addf %153, %152 : vector<8x128xf32>
    %155 = arith.divf %153, %154 : vector<8x128xf32>
    %156 = math.tanh %150 : vector<8x128xf32>
    %157 = vector.extract_strided_slice %155 {offsets = [0, 0], sizes = [8, 32], strides = [1, 1]} : vector<8x128xf32> to vector<8x32xf32>
    %158 = vector.extract_strided_slice %155 {offsets = [0, 32], sizes = [8, 32], strides = [1, 1]} : vector<8x128xf32> to vector<8x32xf32>
    %159 = vector.extract_strided_slice %156 {offsets = [0, 64], sizes = [8, 32], strides = [1, 1]} : vector<8x128xf32> to vector<8x32xf32>
    %160 = vector.extract_strided_slice %155 {offsets = [0, 96], sizes = [8, 32], strides = [1, 1]} : vector<8x128xf32> to vector<8x32xf32>
    %161 = arith.mulf %158, %145 : vector<8x32xf32>
    %162 = arith.mulf %157, %159 : vector<8x32xf32>
    %163 = arith.addf %161, %162 : vector<8x32xf32>
    %164 = math.tanh %163 : vector<8x32xf32>
    %165 = arith.mulf %160, %164 : vector<8x32xf32>
    %c0_39 = arith.constant 0 : index
    %c0_40 = arith.constant 0 : index
    %166 = vector.load %arg13[%c0_39, %c0_40] : memref<56x32xf32, #tpu.memory_space<vmem>>, vector<8x32xf32>
    tpu.vector_store %arg13[%c0_39, %c0_40], %165 {strides = array<i32>} : memref<56x32xf32, #tpu.memory_space<vmem>>, vector<8x32xf32>,
    %167 = vector.extract_strided_slice %19 {offsets = [8, 0], sizes = [8, 128], strides = [1, 1]} : vector<56x128xf32> to vector<8x128xf32>
    %cst_41 = arith.constant dense<0.000000e+00> : vector<8x128xf32>
    %168 = tpu.matmul %165, %1, %cst_41 {dimension_numbers = #tpu.dot_dimension_numbers<[1], [0], [0], [1], [0, 0, 1, 1], [], []>} : vector<8x32xf32>, vector<32x128xf32>, vector<8x128xf32> -> vector<8x128xf32>
    %169 = arith.addf %167, %168 : vector<8x128xf32>
    %170 = arith.negf %169 : vector<8x128xf32>
    %171 = math.exp %170 : vector<8x128xf32>
    %cst_42 = arith.constant 1.000000e+00 : f32
    %172 = vector.broadcast %cst_42 : f32 to vector<8x128xf32>
    %173 = arith.addf %172, %171 : vector<8x128xf32>
    %174 = arith.divf %172, %173 : vector<8x128xf32>
    %175 = math.tanh %169 : vector<8x128xf32>
    %176 = vector.extract_strided_slice %174 {offsets = [0, 0], sizes = [8, 32], strides = [1, 1]} : vector<8x128xf32> to vector<8x32xf32>
    %177 = vector.extract_strided_slice %174 {offsets = [0, 32], sizes = [8, 32], strides = [1, 1]} : vector<8x128xf32> to vector<8x32xf32>
    %178 = vector.extract_strided_slice %175 {offsets = [0, 64], sizes = [8, 32], strides = [1, 1]} : vector<8x128xf32> to vector<8x32xf32>
    %179 = vector.extract_strided_slice %174 {offsets = [0, 96], sizes = [8, 32], strides = [1, 1]} : vector<8x128xf32> to vector<8x32xf32>
    %180 = arith.mulf %177, %163 : vector<8x32xf32>
    %181 = arith.mulf %176, %178 : vector<8x32xf32>
    %182 = arith.addf %180, %181 : vector<8x32xf32>
    %183 = math.tanh %182 : vector<8x32xf32>
    %184 = arith.mulf %179, %183 : vector<8x32xf32>
    %c8 = arith.constant 8 : index
    %c0_43 = arith.constant 0 : index
    %185 = vector.load %arg13[%c8, %c0_43] : memref<56x32xf32, #tpu.memory_space<vmem>>, vector<8x32xf32>
    tpu.vector_store %arg13[%c8, %c0_43], %184 {strides = array<i32>} : memref<56x32xf32, #tpu.memory_space<vmem>>, vector<8x32xf32>,
    %186 = vector.extract_strided_slice %19 {offsets = [16, 0], sizes = [8, 128], strides = [1, 1]} : vector<56x128xf32> to vector<8x128xf32>
    %cst_44 = arith.constant dense<0.000000e+00> : vector<8x128xf32>
    %187 = tpu.matmul %184, %1, %cst_44 {dimension_numbers = #tpu.dot_dimension_numbers<[1], [0], [0], [1], [0, 0, 1, 1], [], []>} : vector<8x32xf32>, vector<32x128xf32>, vector<8x128xf32> -> vector<8x128xf32>
    %188 = arith.addf %186, %187 : vector<8x128xf32>
    %189 = arith.negf %188 : vector<8x128xf32>
    %190 = math.exp %189 : vector<8x128xf32>
    %cst_45 = arith.constant 1.000000e+00 : f32
    %191 = vector.broadcast %cst_45 : f32 to vector<8x128xf32>
    %192 = arith.addf %191, %190 : vector<8x128xf32>
    %193 = arith.divf %191, %192 : vector<8x128xf32>
    %194 = math.tanh %188 : vector<8x128xf32>
    %195 = vector.extract_strided_slice %193 {offsets = [0, 0], sizes = [8, 32], strides = [1, 1]} : vector<8x128xf32> to vector<8x32xf32>
    %196 = vector.extract_strided_slice %193 {offsets = [0, 32], sizes = [8, 32], strides = [1, 1]} : vector<8x128xf32> to vector<8x32xf32>
    %197 = vector.extract_strided_slice %194 {offsets = [0, 64], sizes = [8, 32], strides = [1, 1]} : vector<8x128xf32> to vector<8x32xf32>
    %198 = vector.extract_strided_slice %193 {offsets = [0, 96], sizes = [8, 32], strides = [1, 1]} : vector<8x128xf32> to vector<8x32xf32>
    %199 = arith.mulf %196, %182 : vector<8x32xf32>
    %200 = arith.mulf %195, %197 : vector<8x32xf32>
    %201 = arith.addf %199, %200 : vector<8x32xf32>
    %202 = math.tanh %201 : vector<8x32xf32>
    %203 = arith.mulf %198, %202 : vector<8x32xf32>
    %c16 = arith.constant 16 : index
    %c0_46 = arith.constant 0 : index
    %204 = vector.load %arg13[%c16, %c0_46] : memref<56x32xf32, #tpu.memory_space<vmem>>, vector<8x32xf32>
    tpu.vector_store %arg13[%c16, %c0_46], %203 {strides = array<i32>} : memref<56x32xf32, #tpu.memory_space<vmem>>, vector<8x32xf32>,
    %205 = vector.extract_strided_slice %19 {offsets = [24, 0], sizes = [8, 128], strides = [1, 1]} : vector<56x128xf32> to vector<8x128xf32>
    %cst_47 = arith.constant dense<0.000000e+00> : vector<8x128xf32>
    %206 = tpu.matmul %203, %1, %cst_47 {dimension_numbers = #tpu.dot_dimension_numbers<[1], [0], [0], [1], [0, 0, 1, 1], [], []>} : vector<8x32xf32>, vector<32x128xf32>, vector<8x128xf32> -> vector<8x128xf32>
    %207 = arith.addf %205, %206 : vector<8x128xf32>
    %208 = arith.negf %207 : vector<8x128xf32>
    %209 = math.exp %208 : vector<8x128xf32>
    %cst_48 = arith.constant 1.000000e+00 : f32
    %210 = vector.broadcast %cst_48 : f32 to vector<8x128xf32>
    %211 = arith.addf %210, %209 : vector<8x128xf32>
    %212 = arith.divf %210, %211 : vector<8x128xf32>
    %213 = math.tanh %207 : vector<8x128xf32>
    %214 = vector.extract_strided_slice %212 {offsets = [0, 0], sizes = [8, 32], strides = [1, 1]} : vector<8x128xf32> to vector<8x32xf32>
    %215 = vector.extract_strided_slice %212 {offsets = [0, 32], sizes = [8, 32], strides = [1, 1]} : vector<8x128xf32> to vector<8x32xf32>
    %216 = vector.extract_strided_slice %213 {offsets = [0, 64], sizes = [8, 32], strides = [1, 1]} : vector<8x128xf32> to vector<8x32xf32>
    %217 = vector.extract_strided_slice %212 {offsets = [0, 96], sizes = [8, 32], strides = [1, 1]} : vector<8x128xf32> to vector<8x32xf32>
    %218 = arith.mulf %215, %201 : vector<8x32xf32>
    %219 = arith.mulf %214, %216 : vector<8x32xf32>
    %220 = arith.addf %218, %219 : vector<8x32xf32>
    %221 = math.tanh %220 : vector<8x32xf32>
    %222 = arith.mulf %217, %221 : vector<8x32xf32>
    %c24 = arith.constant 24 : index
    %c0_49 = arith.constant 0 : index
    %223 = vector.load %arg13[%c24, %c0_49] : memref<56x32xf32, #tpu.memory_space<vmem>>, vector<8x32xf32>
    tpu.vector_store %arg13[%c24, %c0_49], %222 {strides = array<i32>} : memref<56x32xf32, #tpu.memory_space<vmem>>, vector<8x32xf32>,
    %224 = vector.extract_strided_slice %19 {offsets = [32, 0], sizes = [8, 128], strides = [1, 1]} : vector<56x128xf32> to vector<8x128xf32>
    %cst_50 = arith.constant dense<0.000000e+00> : vector<8x128xf32>
    %225 = tpu.matmul %222, %1, %cst_50 {dimension_numbers = #tpu.dot_dimension_numbers<[1], [0], [0], [1], [0, 0, 1, 1], [], []>} : vector<8x32xf32>, vector<32x128xf32>, vector<8x128xf32> -> vector<8x128xf32>
    %226 = arith.addf %224, %225 : vector<8x128xf32>
    %227 = arith.negf %226 : vector<8x128xf32>
    %228 = math.exp %227 : vector<8x128xf32>
    %cst_51 = arith.constant 1.000000e+00 : f32
    %229 = vector.broadcast %cst_51 : f32 to vector<8x128xf32>
    %230 = arith.addf %229, %228 : vector<8x128xf32>
    %231 = arith.divf %229, %230 : vector<8x128xf32>
    %232 = math.tanh %226 : vector<8x128xf32>
    %233 = vector.extract_strided_slice %231 {offsets = [0, 0], sizes = [8, 32], strides = [1, 1]} : vector<8x128xf32> to vector<8x32xf32>
    %234 = vector.extract_strided_slice %231 {offsets = [0, 32], sizes = [8, 32], strides = [1, 1]} : vector<8x128xf32> to vector<8x32xf32>
    %235 = vector.extract_strided_slice %232 {offsets = [0, 64], sizes = [8, 32], strides = [1, 1]} : vector<8x128xf32> to vector<8x32xf32>
    %236 = vector.extract_strided_slice %231 {offsets = [0, 96], sizes = [8, 32], strides = [1, 1]} : vector<8x128xf32> to vector<8x32xf32>
    %237 = arith.mulf %234, %220 : vector<8x32xf32>
    %238 = arith.mulf %233, %235 : vector<8x32xf32>
    %239 = arith.addf %237, %238 : vector<8x32xf32>
    %240 = math.tanh %239 : vector<8x32xf32>
    %241 = arith.mulf %236, %240 : vector<8x32xf32>
    %c32 = arith.constant 32 : index
    %c0_52 = arith.constant 0 : index
    %242 = vector.load %arg13[%c32, %c0_52] : memref<56x32xf32, #tpu.memory_space<vmem>>, vector<8x32xf32>
    tpu.vector_store %arg13[%c32, %c0_52], %241 {strides = array<i32>} : memref<56x32xf32, #tpu.memory_space<vmem>>, vector<8x32xf32>,
    %243 = vector.extract_strided_slice %19 {offsets = [40, 0], sizes = [8, 128], strides = [1, 1]} : vector<56x128xf32> to vector<8x128xf32>
    %cst_53 = arith.constant dense<0.000000e+00> : vector<8x128xf32>
    %244 = tpu.matmul %241, %1, %cst_53 {dimension_numbers = #tpu.dot_dimension_numbers<[1], [0], [0], [1], [0, 0, 1, 1], [], []>} : vector<8x32xf32>, vector<32x128xf32>, vector<8x128xf32> -> vector<8x128xf32>
    %245 = arith.addf %243, %244 : vector<8x128xf32>
    %246 = arith.negf %245 : vector<8x128xf32>
    %247 = math.exp %246 : vector<8x128xf32>
    %cst_54 = arith.constant 1.000000e+00 : f32
    %248 = vector.broadcast %cst_54 : f32 to vector<8x128xf32>
    %249 = arith.addf %248, %247 : vector<8x128xf32>
    %250 = arith.divf %248, %249 : vector<8x128xf32>
    %251 = math.tanh %245 : vector<8x128xf32>
    %252 = vector.extract_strided_slice %250 {offsets = [0, 0], sizes = [8, 32], strides = [1, 1]} : vector<8x128xf32> to vector<8x32xf32>
    %253 = vector.extract_strided_slice %250 {offsets = [0, 32], sizes = [8, 32], strides = [1, 1]} : vector<8x128xf32> to vector<8x32xf32>
    %254 = vector.extract_strided_slice %251 {offsets = [0, 64], sizes = [8, 32], strides = [1, 1]} : vector<8x128xf32> to vector<8x32xf32>
    %255 = vector.extract_strided_slice %250 {offsets = [0, 96], sizes = [8, 32], strides = [1, 1]} : vector<8x128xf32> to vector<8x32xf32>
    %256 = arith.mulf %253, %239 : vector<8x32xf32>
    %257 = arith.mulf %252, %254 : vector<8x32xf32>
    %258 = arith.addf %256, %257 : vector<8x32xf32>
    %259 = math.tanh %258 : vector<8x32xf32>
    %260 = arith.mulf %255, %259 : vector<8x32xf32>
    %c40 = arith.constant 40 : index
    %c0_55 = arith.constant 0 : index
    %261 = vector.load %arg13[%c40, %c0_55] : memref<56x32xf32, #tpu.memory_space<vmem>>, vector<8x32xf32>
    tpu.vector_store %arg13[%c40, %c0_55], %260 {strides = array<i32>} : memref<56x32xf32, #tpu.memory_space<vmem>>, vector<8x32xf32>,
    %262 = vector.extract_strided_slice %19 {offsets = [48, 0], sizes = [8, 128], strides = [1, 1]} : vector<56x128xf32> to vector<8x128xf32>
    %cst_56 = arith.constant dense<0.000000e+00> : vector<8x128xf32>
    %263 = tpu.matmul %260, %1, %cst_56 {dimension_numbers = #tpu.dot_dimension_numbers<[1], [0], [0], [1], [0, 0, 1, 1], [], []>} : vector<8x32xf32>, vector<32x128xf32>, vector<8x128xf32> -> vector<8x128xf32>
    %264 = arith.addf %262, %263 : vector<8x128xf32>
    %265 = arith.negf %264 : vector<8x128xf32>
    %266 = math.exp %265 : vector<8x128xf32>
    %cst_57 = arith.constant 1.000000e+00 : f32
    %267 = vector.broadcast %cst_57 : f32 to vector<8x128xf32>
    %268 = arith.addf %267, %266 : vector<8x128xf32>
    %269 = arith.divf %267, %268 : vector<8x128xf32>
    %270 = math.tanh %264 : vector<8x128xf32>
    %271 = vector.extract_strided_slice %269 {offsets = [0, 0], sizes = [8, 32], strides = [1, 1]} : vector<8x128xf32> to vector<8x32xf32>
    %272 = vector.extract_strided_slice %269 {offsets = [0, 32], sizes = [8, 32], strides = [1, 1]} : vector<8x128xf32> to vector<8x32xf32>
    %273 = vector.extract_strided_slice %270 {offsets = [0, 64], sizes = [8, 32], strides = [1, 1]} : vector<8x128xf32> to vector<8x32xf32>
    %274 = vector.extract_strided_slice %269 {offsets = [0, 96], sizes = [8, 32], strides = [1, 1]} : vector<8x128xf32> to vector<8x32xf32>
    %275 = arith.mulf %272, %258 : vector<8x32xf32>
    %276 = arith.mulf %271, %273 : vector<8x32xf32>
    %277 = arith.addf %275, %276 : vector<8x32xf32>
    %278 = math.tanh %277 : vector<8x32xf32>
    %279 = arith.mulf %274, %278 : vector<8x32xf32>
    %c48 = arith.constant 48 : index
    %c0_58 = arith.constant 0 : index
    %280 = vector.load %arg13[%c48, %c0_58] : memref<56x32xf32, #tpu.memory_space<vmem>>, vector<8x32xf32>
    tpu.vector_store %arg13[%c48, %c0_58], %279 {strides = array<i32>} : memref<56x32xf32, #tpu.memory_space<vmem>>, vector<8x32xf32>,
    %c0_59 = arith.constant 0 : index
    %c0_60 = arith.constant 0 : index
    %281 = vector.load %arg13[%c0_59, %c0_60] : memref<56x32xf32, #tpu.memory_space<vmem>>, vector<56x32xf32>
    %c0_61 = arith.constant 0 : index
    %c0_62 = arith.constant 0 : index
    %282 = vector.load %arg10[%c0_61, %c0_62] : memref<32x32xf32, #tpu.memory_space<vmem>>, vector<32x32xf32>
    %cst_63 = arith.constant dense<0.000000e+00> : vector<56x32xf32>
    %283 = tpu.matmul %281, %282, %cst_63 {dimension_numbers = #tpu.dot_dimension_numbers<[1], [0], [0], [1], [0, 0, 1, 1], [], []>} : vector<56x32xf32>, vector<32x32xf32>, vector<56x32xf32> -> vector<56x32xf32>
    %c0_64 = arith.constant 0 : index
    %c0_65 = arith.constant 0 : index
    %284 = vector.load %arg11[%c0_64, %c0_65] : memref<1x32xf32, #tpu.memory_space<vmem>>, vector<1x32xf32>
    %285 = vector.broadcast %284 : vector<1x32xf32> to vector<56x32xf32>
    %286 = arith.addf %283, %285 : vector<56x32xf32>
    %287 = vector.extract_strided_slice %5 {offsets = [8, 0], sizes = [56, 32], strides = [1, 1]} : vector<64x32xf32> to vector<56x32xf32>
    %cst_66 = arith.constant dense<0xFF800000> : vector<56xf32>
    %288 = vector.multi_reduction <maximumf>, %286, %cst_66 [1] : vector<56x32xf32> to vector<56xf32>
    %289 = vector.shape_cast %288 : vector<56xf32> to vector<56x1xf32>
    %290 = vector.broadcast %289 : vector<56x1xf32> to vector<56x32xf32>
    %291 = arith.subf %286, %290 : vector<56x32xf32>
    %292 = math.exp %291 : vector<56x32xf32>
    %cst_67 = arith.constant dense<0.000000e+00> : vector<56xf32>
    %293 = vector.multi_reduction <add>, %292, %cst_67 [1] : vector<56x32xf32> to vector<56xf32>
    %294 = vector.shape_cast %293 : vector<56xf32> to vector<56x1xf32>
    %295 = math.log %294 : vector<56x1xf32>
    %296 = arith.addf %289, %295 : vector<56x1xf32>
    %297 = arith.mulf %286, %287 : vector<56x32xf32>
    %cst_68 = arith.constant dense<0.000000e+00> : vector<56xf32>
    %298 = vector.multi_reduction <add>, %297, %cst_68 [1] : vector<56x32xf32> to vector<56xf32>
    %299 = vector.shape_cast %298 : vector<56xf32> to vector<56x1xf32>
    %300 = arith.subf %296, %299 : vector<56x1xf32>
    %301 = vector.extract_strided_slice %7 {offsets = [8, 0], sizes = [56, 1], strides = [1, 1]} : vector<64x1xf32> to vector<56x1xf32>
    %302 = arith.mulf %300, %301 : vector<56x1xf32>
    %303 = vector.shape_cast %302 : vector<56x1xf32> to vector<1x56x1xf32>
    %cst_69 = arith.constant dense<0.000000e+00> : vector<1xf32>
    %304 = vector.multi_reduction <add>, %303, %cst_69 [1, 2] : vector<1x56x1xf32> to vector<1xf32>
    %305 = vector.shape_cast %304 : vector<1xf32> to vector<1x1x1xf32>
    %306 = vector.extract %305[0, 0, 0] : f32 from vector<1x1x1xf32>
    %307 = vector.extract_strided_slice %3 {offsets = [0, 0], sizes = [8, 32], strides = [1, 1]} : vector<64x32xf32> to vector<8x32xf32>
    %308 = vector.extract_strided_slice %5 {offsets = [0, 0], sizes = [8, 32], strides = [1, 1]} : vector<64x32xf32> to vector<8x32xf32>
    %cst_70 = arith.constant dense<0xFF800000> : vector<8xf32>
    %309 = vector.multi_reduction <maximumf>, %307, %cst_70 [1] : vector<8x32xf32> to vector<8xf32>
    %310 = vector.shape_cast %309 : vector<8xf32> to vector<8x1xf32>
    %311 = vector.broadcast %310 : vector<8x1xf32> to vector<8x32xf32>
    %312 = arith.subf %307, %311 : vector<8x32xf32>
    %313 = math.exp %312 : vector<8x32xf32>
    %cst_71 = arith.constant dense<0.000000e+00> : vector<8xf32>
    %314 = vector.multi_reduction <add>, %313, %cst_71 [1] : vector<8x32xf32> to vector<8xf32>
    %315 = vector.shape_cast %314 : vector<8xf32> to vector<8x1xf32>
    %316 = math.log %315 : vector<8x1xf32>
    %317 = arith.addf %310, %316 : vector<8x1xf32>
    %318 = arith.mulf %307, %308 : vector<8x32xf32>
    %cst_72 = arith.constant dense<0.000000e+00> : vector<8xf32>
    %319 = vector.multi_reduction <add>, %318, %cst_72 [1] : vector<8x32xf32> to vector<8xf32>
    %320 = vector.shape_cast %319 : vector<8xf32> to vector<8x1xf32>
    %321 = arith.subf %317, %320 : vector<8x1xf32>
    %322 = vector.extract_strided_slice %7 {offsets = [0, 0], sizes = [8, 1], strides = [1, 1]} : vector<64x1xf32> to vector<8x1xf32>
    %323 = arith.mulf %321, %322 : vector<8x1xf32>
    %324 = vector.shape_cast %323 : vector<8x1xf32> to vector<1x8x1xf32>
    %cst_73 = arith.constant dense<0.000000e+00> : vector<1xf32>
    %325 = vector.multi_reduction <add>, %324, %cst_73 [1, 2] : vector<1x8x1xf32> to vector<1xf32>
    %326 = vector.shape_cast %325 : vector<1xf32> to vector<1x1x1xf32>
    %327 = vector.extract %326[0, 0, 0] : f32 from vector<1x1x1xf32>
    %328 = arith.addf %306, %327 : f32
    %329 = vector.broadcast %328 : f32 to vector<1x8x128xf32>
    %c0_74 = arith.constant 0 : index
    %c0_75 = arith.constant 0 : index
    %c0_76 = arith.constant 0 : index
    %330 = vector.load %arg12[%c0_74, %c0_75, %c0_76] : memref<1x8x128xf32, #tpu.memory_space<vmem>>, vector<1x8x128xf32>
    tpu.vector_store %arg12[%c0_74, %c0_75, %c0_76], %329 {strides = array<i32>} : memref<1x8x128xf32, #tpu.memory_space<vmem>>, vector<1x8x128xf32>,
    return
  }
  func.func @transform_0(%arg0: i32) -> (i32, i32, i32) {
    %c0_i32 = arith.constant 0 : i32
    %c0_i32_0 = arith.constant 0 : i32
    %c0_i32_1 = arith.constant 0 : i32
    return %arg0, %c0_i32, %c0_i32_0 : i32, i32, i32
  }
  func.func @transform_1(%arg0: i32) -> (i32, i32, i32) {
    %c0_i32 = arith.constant 0 : i32
    %c0_i32_0 = arith.constant 0 : i32
    %c0_i32_1 = arith.constant 0 : i32
    return %arg0, %c0_i32, %c0_i32_0 : i32, i32, i32
  }
  func.func @transform_2(%arg0: i32) -> (i32, i32, i32) {
    %c0_i32 = arith.constant 0 : i32
    %c0_i32_0 = arith.constant 0 : i32
    %c0_i32_1 = arith.constant 0 : i32
    return %arg0, %c0_i32, %c0_i32_0 : i32, i32, i32
  }
  func.func @transform_3(%arg0: i32) -> (i32, i32) {
    %c0_i32 = arith.constant 0 : i32
    %c0_i32_0 = arith.constant 0 : i32
    %c0_i32_1 = arith.constant 0 : i32
    return %c0_i32, %c0_i32_0 : i32, i32
  }
  func.func @transform_4(%arg0: i32) -> (i32, i32) {
    %c0_i32 = arith.constant 0 : i32
    %c0_i32_0 = arith.constant 0 : i32
    %c0_i32_1 = arith.constant 0 : i32
    return %c0_i32, %c0_i32_0 : i32, i32
  }
  func.func @transform_5(%arg0: i32) -> (i32, i32) {
    %c0_i32 = arith.constant 0 : i32
    %c0_i32_0 = arith.constant 0 : i32
    %c0_i32_1 = arith.constant 0 : i32
    return %c0_i32, %c0_i32_0 : i32, i32
  }
  func.func @transform_6(%arg0: i32) -> (i32, i32) {
    %c0_i32 = arith.constant 0 : i32
    %c0_i32_0 = arith.constant 0 : i32
    %c0_i32_1 = arith.constant 0 : i32
    return %c0_i32, %c0_i32_0 : i32, i32
  }
  func.func @transform_7(%arg0: i32) -> (i32, i32) {
    %c0_i32 = arith.constant 0 : i32
    %c0_i32_0 = arith.constant 0 : i32
    %c0_i32_1 = arith.constant 0 : i32
    return %c0_i32, %c0_i32_0 : i32, i32
  }
  func.func @transform_8(%arg0: i32) -> (i32, i32) {
    %c0_i32 = arith.constant 0 : i32
    %c0_i32_0 = arith.constant 0 : i32
    %c0_i32_1 = arith.constant 0 : i32
    return %c0_i32, %c0_i32_0 : i32, i32
  }
  func.func @transform_9(%arg0: i32) -> (i32, i32) {
    %c0_i32 = arith.constant 0 : i32
    %c0_i32_0 = arith.constant 0 : i32
    %c0_i32_1 = arith.constant 0 : i32
    return %c0_i32, %c0_i32_0 : i32, i32
  }
  func.func @transform_10(%arg0: i32) -> (i32, i32) {
    %c0_i32 = arith.constant 0 : i32
    %c0_i32_0 = arith.constant 0 : i32
    %c0_i32_1 = arith.constant 0 : i32
    return %c0_i32, %c0_i32_0 : i32, i32
  }
  func.func @transform_11(%arg0: i32) -> (i32, i32, i32) {
    %c0_i32 = arith.constant 0 : i32
    %c0_i32_0 = arith.constant 0 : i32
    %c0_i32_1 = arith.constant 0 : i32
    return %arg0, %c0_i32, %c0_i32_0 : i32, i32, i32
  }
}

</mosaic_0001>

<llo_original>
// kernel: tpu_custom_call.1
$region0: #{tpu_custom_call.1}
  #allocation0 [shape = 'u32[]', space=smem, size = 0x4, offset = 0x4, fixed_abs, tag = 'smem constant byte address 0x4 - core index']
  #allocation1 [shape = 'u32[144,128]{1,0:T(1,128)}', space=vmem, size = 0x12000, scoped, tag = 'internal scratch']
  #allocation2 [shape = 'f32[56,32]{1,0:T(8,128)}', space=vmem, size = 0x7000, scoped, tag = 'scratch operand']
  %s0 = inlined_call_operand.vmem [shape: f32[1,64,32], index: 0, kind: input, shape index: {}]
  %s1 = inlined_call_operand.vmem [shape: f32[1,64,32], index: 1, kind: input, shape index: {}]
  %s2 = inlined_call_operand.vmem [shape: f32[1,64,1], index: 2, kind: input, shape index: {}]
  %s3 = inlined_call_operand.vmem [shape: f32[32,128], index: 3, kind: input, shape index: {}]
  %s4 = inlined_call_operand.vmem [shape: f32[32,128], index: 4, kind: input, shape index: {}]
  %s5 = inlined_call_operand.vmem [shape: f32[1,128], index: 5, kind: input, shape index: {}]
  %s6 = inlined_call_operand.vmem [shape: f32[32,128], index: 6, kind: input, shape index: {}]
  %s7 = inlined_call_operand.vmem [shape: f32[32,128], index: 7, kind: input, shape index: {}]
  %s8 = inlined_call_operand.vmem [shape: f32[1,128], index: 8, kind: input, shape index: {}]
  %s9 = inlined_call_operand.vmem [shape: f32[32,32], index: 9, kind: input, shape index: {}]
  %s10 = inlined_call_operand.vmem [shape: f32[1,32], index: 10, kind: input, shape index: {}]
  %s11 = inlined_call_operand.hbm [shape: f32[1,8,128], index: 11, kind: output, shape index: {}]
  %s12 = sld [smem:[#allocation0]]
  $region54: #{tpu_custom_call.1} parent=0
    _
  %s14 = ssub.s32 1, %s12
  %s15 = scalar_select 0, %s14, %s12
  $region1: #{tpu_custom_call.1} parent=0
    #allocation3 [shape = 'u8[4096]{0}', space=vmem, size = 0x1000, scoped, tag = 'output window, operand 0, single buffered']
    #allocation4 [shape = 's32[1]{0}', space=sflag, size = 0x4, scoped, tag = 'scoped memory for tpu_custom_call.1']
    %16 = vsyncpa [#allocation4], 0
    // Predicated region
    $region2: #{tpu_custom_call.1} parent=1 // pred_check
      _
    $region3: #{tpu_custom_call.1} parent=1 // pred_check_branch
      %18 = sbr.rel (0) target = $region5
    $region4: #{tpu_custom_call.1} parent=1 // pred_region
      _
    $region5: #{tpu_custom_call.1} parent=1 // pred_fallthru
      _
    // Predicated region
    $region6: #{tpu_custom_call.1} parent=1 // pred_check
      _
    $region7: #{tpu_custom_call.1} parent=1 // pred_check_branch
      %20 = sbr.rel (0) target = $region9
    $region8: #{tpu_custom_call.1} parent=1 // pred_region
      _
    $region9: #{tpu_custom_call.1} parent=1 // pred_fallthru
      _
    // Predicated region
    $region10: #{tpu_custom_call.1} parent=1 // pred_check
      _
    $region11: #{tpu_custom_call.1} parent=1 // pred_check_branch
      %22 = sbr.rel (0) target = $region13
    $region12: #{tpu_custom_call.1} parent=1 // pred_region
      _
    $region13: #{tpu_custom_call.1} parent=1 // pred_fallthru
      _
    // Predicated region
    $region14: #{tpu_custom_call.1} parent=1 // pred_check
      _
    $region15: #{tpu_custom_call.1} parent=1 // pred_check_branch
      %24 = sbr.rel (0) target = $region17
    $region16: #{tpu_custom_call.1} parent=1 // pred_region
      _
    $region17: #{tpu_custom_call.1} parent=1 // pred_fallthru
      _
    // Predicated region
    $region18: #{tpu_custom_call.1} parent=1 // pred_check
      _
    $region19: #{tpu_custom_call.1} parent=1 // pred_check_branch
      %26 = sbr.rel (0) target = $region21
    $region20: #{tpu_custom_call.1} parent=1 // pred_region
      _
    $region21: #{tpu_custom_call.1} parent=1 // pred_fallthru
      _
    // Predicated region
    $region22: #{tpu_custom_call.1} parent=1 // pred_check
      _
    $region23: #{tpu_custom_call.1} parent=1 // pred_check_branch
      %28 = sbr.rel (0) target = $region25
    $region24: #{tpu_custom_call.1} parent=1 // pred_region
      _
    $region25: #{tpu_custom_call.1} parent=1 // pred_fallthru
      _
    // Predicated region
    $region26: #{tpu_custom_call.1} parent=1 // pred_check
      _
    $region27: #{tpu_custom_call.1} parent=1 // pred_check_branch
      %30 = sbr.rel (0) target = $region29
    $region28: #{tpu_custom_call.1} parent=1 // pred_region
      _
    $region29: #{tpu_custom_call.1} parent=1 // pred_fallthru
      _
    // Predicated region
    $region30: #{tpu_custom_call.1} parent=1 // pred_check
      _
    $region31: #{tpu_custom_call.1} parent=1 // pred_check_branch
      %32 = sbr.rel (0) target = $region33
    $region32: #{tpu_custom_call.1} parent=1 // pred_region
      _
    $region33: #{tpu_custom_call.1} parent=1 // pred_fallthru
      _
    // Predicated region
    $region34: #{tpu_custom_call.1} parent=1 // pred_check
      _
    $region35: #{tpu_custom_call.1} parent=1 // pred_check_branch
      %34 = sbr.rel (0) target = $region37
    $region36: #{tpu_custom_call.1} parent=1 // pred_region
      _
    $region37: #{tpu_custom_call.1} parent=1 // pred_fallthru
      _
    // Predicated region
    $region38: #{tpu_custom_call.1} parent=1 // pred_check
      _
    $region39: #{tpu_custom_call.1} parent=1 // pred_check_branch
      %36 = sbr.rel (0) target = $region41
    $region40: #{tpu_custom_call.1} parent=1 // pred_region
      _
    $region41: #{tpu_custom_call.1} parent=1 // pred_fallthru
      _
    // Predicated region
    $region42: #{tpu_custom_call.1} parent=1 // pred_check
      _
    $region43: #{tpu_custom_call.1} parent=1 // pred_check_branch
      %38 = sbr.rel (0) target = $region45
    $region44: #{tpu_custom_call.1} parent=1 // pred_region
      _
    $region45: #{tpu_custom_call.1} parent=1 // pred_fallthru
      _
    %v39 = vld [vmem:[%s4] sm:$0xff]
    %v40 = vld [vmem:[%s4 + $0x8] sm:$0xff]
    %v41 = vld [vmem:[%s4 + $0x10] sm:$0xff]
    %v42 = vld [vmem:[%s4 + $0x18] sm:$0xff]
    %v43 = vld [vmem:[%s7] sm:$0xff]
    %v44 = vld [vmem:[%s7 + $0x8] sm:$0xff]
    %v45 = vld [vmem:[%s7 + $0x10] sm:$0xff]
    %v46 = vld [vmem:[%s7 + $0x18] sm:$0xff]
    %v47 = vld [vmem:[%s0] sm:$0xff]
    %v48 = vld [vmem:[%s0 + $0x8] sm:$0xff]
    %v49 = vld [vmem:[%s0 + $0x10] sm:$0xff]
    %v50 = vld [vmem:[%s0 + $0x18] sm:$0xff]
    %v51 = vld [vmem:[%s0 + $0x20] sm:$0xff]
    %v52 = vld [vmem:[%s0 + $0x28] sm:$0xff]
    %v53 = vld [vmem:[%s0 + $0x30] sm:$0xff]
    %v54 = vld [vmem:[%s0 + $0x38] sm:$0xff]
    %v55 = vld [vmem:[%s1] sm:$0xff]
    %v56 = vld [vmem:[%s1 + $0x8] sm:$0xff]
    %v57 = vld [vmem:[%s1 + $0x10] sm:$0xff]
    %v58 = vld [vmem:[%s1 + $0x18] sm:$0xff]
    %v59 = vld [vmem:[%s1 + $0x20] sm:$0xff]
    %v60 = vld [vmem:[%s1 + $0x28] sm:$0xff]
    %v61 = vld [vmem:[%s1 + $0x30] sm:$0xff]
    %v62 = vld [vmem:[%s1 + $0x38] sm:$0xff]
    %v63 = vld [vmem:[%s2] sm:$0xff]
    %v64 = vld [vmem:[%s2 + $0x8] sm:$0xff]
    %v65 = vld [vmem:[%s2 + $0x10] sm:$0xff]
    %v66 = vld [vmem:[%s2 + $0x18] sm:$0xff]
    %v67 = vld [vmem:[%s2 + $0x20] sm:$0xff]
    %v68 = vld [vmem:[%s2 + $0x28] sm:$0xff]
    %v69 = vld [vmem:[%s2 + $0x30] sm:$0xff]
    %v70 = vld [vmem:[%s2 + $0x38] sm:$0xff]
    %v71 = vld [vmem:[%s3] sm:$0xff]
    %v72 = vld [vmem:[%s3 + $0x8] sm:$0xff]
    %v73 = vld [vmem:[%s3 + $0x10] sm:$0xff]
    %v74 = vld [vmem:[%s3 + $0x18] sm:$0xff]
    %v75 = vld [vmem:[%s5] sm:$0x1]
    %v77 = vlaneseq
    %v78 = vshrl.u32 %v77, 7
    %v79 = vsub.s32 0, %v78
    %v80 = vrot.slane %v75, %v79
    %vm82 = vcmask 261120
    %v84 = vsel %vm82, %v48, 0
    %v87 = vsel %vm82, %v49, 0
    %v90 = vsel %vm82, %v50, 0
    %v93 = vsel %vm82, %v51, 0
    %v96 = vsel %vm82, %v52, 0
    %v99 = vsel %vm82, %v53, 0
    %v102 = vsel %vm82, %v54, 0
    %104 = vmatprep.subr.mxu0 0.0
    %105 = vmatpush1.msra.mxu0 %v71
    %106 = vmatprep.subr.mxu0 0.0
    %107 = vmatpush1.msra.mxu0 %v72
    %108 = vmatprep.subr.mxu0 0.0
    %109 = vmatpush1.msra.mxu0 %v73
    %110 = vmatprep.subr.mxu0 0.0
    %111 = vmatpush1.msra.mxu0 %v74
    %112 = vmatprep.subr.mxu0 0.0
    %113 = vmatpush1.msra.mxu0 0.0
    %114 = vmatprep.subr.mxu0 0.0
    %115 = vmatpush1.msra.mxu0 0.0
    %116 = vmatprep.subr.mxu0 0.0
    %117 = vmatpush1.msra.mxu0 0.0
    %118 = vmatprep.subr.mxu0 0.0
    %119 = vmatpush1.msra.mxu0 0.0
    %120 = vmatprep.subr.mxu0 0.0
    %121 = vmatpush1.msra.mxu0 0.0
    %122 = vmatprep.subr.mxu0 0.0
    %123 = vmatpush1.msra.mxu0 0.0
    %124 = vmatprep.subr.mxu0 0.0
    %125 = vmatpush1.msra.mxu0 0.0
    %126 = vmatprep.subr.mxu0 0.0
    %127 = vmatpush1.msra.mxu0 0.0
    %128 = vmatprep.subr.mxu0 0.0
    %129 = vmatpush1.msra.mxu0 0.0
    %130 = vmatprep.subr.mxu0 0.0
    %131 = vmatpush1.msra.mxu0 0.0
    %132 = vmatprep.subr.mxu0 0.0
    %133 = vmatpush1.msra.mxu0 0.0
    %134 = vmatprep.subr.mxu0 0.0
    %135 = vmatpush1.msra.mxu0 0.0
    %136 = vmatprep.subr.mxu0 0.0
    %137 = vmatpush1.msra.mxu0 0.0
    %138 = vmatprep.subr.mxu0 0.0
    %139 = vmatpush1.msra.mxu0 0.0
    %140 = vmatprep.subr.mxu0 0.0
    %141 = vmatpush1.msra.mxu0 0.0
    %142 = vmatprep.subr.mxu0 0.0
    %143 = vmatpush1.msra.mxu0 0.0
    %144 = vmatprep.subr.mxu0 0.0
    %145 = vmatpush1.msra.mxu0 0.0
    %146 = vmatprep.subr.mxu0 0.0
    %147 = vmatpush1.msra.mxu0 0.0
    %148 = vmatprep.subr.mxu0 0.0
    %149 = vmatpush1.msra.mxu0 0.0
    %150 = vmatprep.subr.mxu0 0.0
    %151 = vmatpush1.msra.mxu0 0.0
    %152 = vmatprep.subr.mxu0 0.0
    %153 = vmatpush1.msra.mxu0 0.0
    %154 = vmatprep.subr.mxu0 0.0
    %155 = vmatpush1.msra.mxu0 0.0
    %156 = vmatprep.subr.mxu0 0.0
    %157 = vmatpush1.msra.mxu0 0.0
    %158 = vmatprep.subr.mxu0 0.0
    %159 = vmatpush1.msra.mxu0 0.0
    %160 = vmatprep.subr.mxu0 0.0
    %161 = vmatpush1.msra.mxu0 0.0
    %162 = vmatprep.subr.mxu0 0.0
    %163 = vmatpush1.msra.mxu0 0.0
    %164 = vmatprep.subr.mxu0 0.0
    %165 = vmatpush1.msra.mxu0 0.0
    %166 = vmatprep.subr.mxu0 0.0
    %167 = vmatpush1.msra.mxu0 0.0
    %168 = vmatprep.mubr.f32.mxu0 0.0
    %169 = vmatmul.mubr.f32.gmra.mrb[0].mxu0 %v84
    %v170 = vpop.f32.mrb[0].mxu0
    %v171 = vadd.f32 %v80, %v170
    %v172 = vpop.f32.mrb[0].mxu0
    %173 = vmatprep.mubr.f32.mxu0 0.0
    %174 = vmatmul.mubr.f32.gmra.mrb[0].mxu0 %v87
    %v175 = vpop.f32.mrb[0].mxu0
    %v176 = vadd.f32 %v80, %v175
    %v177 = vpop.f32.mrb[0].mxu0
    %178 = vmatprep.mubr.f32.mxu0 0.0
    %179 = vmatmul.mubr.f32.gmra.mrb[0].mxu0 %v90
    %v180 = vpop.f32.mrb[0].mxu0
    %v181 = vadd.f32 %v80, %v180
    %v182 = vpop.f32.mrb[0].mxu0
    %183 = vmatprep.mubr.f32.mxu0 0.0
    %184 = vmatmul.mubr.f32.gmra.mrb[0].mxu0 %v93
    %v185 = vpop.f32.mrb[0].mxu0
    %v186 = vadd.f32 %v80, %v185
    %v187 = vpop.f32.mrb[0].mxu0
    %188 = vmatprep.mubr.f32.mxu0 0.0
    %189 = vmatmul.mubr.f32.gmra.mrb[0].mxu0 %v96
    %v190 = vpop.f32.mrb[0].mxu0
    %v191 = vadd.f32 %v80, %v190
    %v192 = vpop.f32.mrb[0].mxu0
    %193 = vmatprep.mubr.f32.mxu0 0.0
    %194 = vmatmul.mubr.f32.gmra.mrb[0].mxu0 %v99
    %v195 = vpop.f32.mrb[0].mxu0
    %v196 = vadd.f32 %v80, %v195
    %v197 = vpop.f32.mrb[0].mxu0
    %198 = vmatprep.mubr.f32.mxu0 0.0
    %199 = vmatmul.mubr.f32.gmra.mrb[0].mxu0 %v102
    %v200 = vpop.f32.mrb[0].mxu0
    %v201 = vadd.f32 %v80, %v200
    %v202 = vpop.f32.mrb[0].mxu0
    %203 = vdwg.mxu0
    %v204 = vld [vmem:[%s6] sm:$0xff]
    %v205 = vld [vmem:[%s6 + $0x8] sm:$0xff]
    %v206 = vld [vmem:[%s6 + $0x10] sm:$0xff]
    %v207 = vld [vmem:[%s6 + $0x18] sm:$0xff]
    %v208 = vld [vmem:[%s8] sm:$0x1]
    %v210 = vlaneseq
    %v211 = vshrl.u32 %v210, 7
    %v212 = vsub.s32 0, %v211
    %v213 = vrot.slane %v208, %v212
    %v216 = vsel %vm82, %v47, 0
    %218 = vmatprep.subr.mxu0 0.0
    %219 = vmatpush1.msra.mxu0 %v204
    %220 = vmatprep.subr.mxu0 0.0
    %221 = vmatpush1.msra.mxu0 %v205
    %222 = vmatprep.subr.mxu0 0.0
    %223 = vmatpush1.msra.mxu0 %v206
    %224 = vmatprep.subr.mxu0 0.0
    %225 = vmatpush1.msra.mxu0 %v207
    %226 = vmatprep.subr.mxu0 0.0
    %227 = vmatpush1.msra.mxu0 0.0
    %228 = vmatprep.subr.mxu0 0.0
    %229 = vmatpush1.msra.mxu0 0.0
    %230 = vmatprep.subr.mxu0 0.0
    %231 = vmatpush1.msra.mxu0 0.0
    %232 = vmatprep.subr.mxu0 0.0
    %233 = vmatpush1.msra.mxu0 0.0
    %234 = vmatprep.subr.mxu0 0.0
    %235 = vmatpush1.msra.mxu0 0.0
    %236 = vmatprep.subr.mxu0 0.0
    %237 = vmatpush1.msra.mxu0 0.0
    %238 = vmatprep.subr.mxu0 0.0
    %239 = vmatpush1.msra.mxu0 0.0
    %240 = vmatprep.subr.mxu0 0.0
    %241 = vmatpush1.msra.mxu0 0.0
    %242 = vmatprep.subr.mxu0 0.0
    %243 = vmatpush1.msra.mxu0 0.0
    %244 = vmatprep.subr.mxu0 0.0
    %245 = vmatpush1.msra.mxu0 0.0
    %246 = vmatprep.subr.mxu0 0.0
    %247 = vmatpush1.msra.mxu0 0.0
    %248 = vmatprep.subr.mxu0 0.0
    %249 = vmatpush1.msra.mxu0 0.0
    %250 = vmatprep.subr.mxu0 0.0
    %251 = vmatpush1.msra.mxu0 0.0
    %252 = vmatprep.subr.mxu0 0.0
    %253 = vmatpush1.msra.mxu0 0.0
    %254 = vmatprep.subr.mxu0 0.0
    %255 = vmatpush1.msra.mxu0 0.0
    %256 = vmatprep.subr.mxu0 0.0
    %257 = vmatpush1.msra.mxu0 0.0
    %258 = vmatprep.subr.mxu0 0.0
    %259 = vmatpush1.msra.mxu0 0.0
    %260 = vmatprep.subr.mxu0 0.0
    %261 = vmatpush1.msra.mxu0 0.0
    %262 = vmatprep.subr.mxu0 0.0
    %263 = vmatpush1.msra.mxu0 0.0
    %264 = vmatprep.subr.mxu0 0.0
    %265 = vmatpush1.msra.mxu0 0.0
    %266 = vmatprep.subr.mxu0 0.0
    %267 = vmatpush1.msra.mxu0 0.0
    %268 = vmatprep.subr.mxu0 0.0
    %269 = vmatpush1.msra.mxu0 0.0
    %270 = vmatprep.subr.mxu0 0.0
    %271 = vmatpush1.msra.mxu0 0.0
    %272 = vmatprep.subr.mxu0 0.0
    %273 = vmatpush1.msra.mxu0 0.0
    %274 = vmatprep.subr.mxu0 0.0
    %275 = vmatpush1.msra.mxu0 0.0
    %276 = vmatprep.subr.mxu0 0.0
    %277 = vmatpush1.msra.mxu0 0.0
    %278 = vmatprep.subr.mxu0 0.0
    %279 = vmatpush1.msra.mxu0 0.0
    %280 = vmatprep.subr.mxu0 0.0
    %281 = vmatpush1.msra.mxu0 0.0
    %282 = vmatprep.mubr.f32.mxu0 0.0
    %283 = vmatmul.mubr.f32.gmra.mrb[0].mxu0 %v216
    %v284 = vpop.f32.mrb[0].mxu0
    %v285 = vadd.f32 %v213, %v284
    %v286 = vpop.f32.mrb[0].mxu0
    %287 = vmatprep.mubr.f32.mxu0 0.0
    %288 = vmatmul.mubr.f32.gmra.mrb[0].mxu0 %v84
    %v289 = vpop.f32.mrb[0].mxu0
    %v290 = vadd.f32 %v213, %v289
    %v291 = vpop.f32.mrb[0].mxu0
    %292 = vmatprep.mubr.f32.mxu0 0.0
    %293 = vmatmul.mubr.f32.gmra.mrb[0].mxu0 %v87
    %v294 = vpop.f32.mrb[0].mxu0
    %v295 = vadd.f32 %v213, %v294
    %v296 = vpop.f32.mrb[0].mxu0
    %297 = vmatprep.mubr.f32.mxu0 0.0
    %298 = vmatmul.mubr.f32.gmra.mrb[0].mxu0 %v90
    %v299 = vpop.f32.mrb[0].mxu0
    %v300 = vadd.f32 %v213, %v299
    %v301 = vpop.f32.mrb[0].mxu0
    %302 = vmatprep.mubr.f32.mxu0 0.0
    %303 = vmatmul.mubr.f32.gmra.mrb[0].mxu0 %v93
    %v304 = vpop.f32.mrb[0].mxu0
    %v305 = vadd.f32 %v213, %v304
    %v306 = vpop.f32.mrb[0].mxu0
    %307 = vmatprep.mubr.f32.mxu0 0.0
    %308 = vmatmul.mubr.f32.gmra.mrb[0].mxu0 %v96
    %v309 = vpop.f32.mrb[0].mxu0
    %v310 = vadd.f32 %v213, %v309
    %v311 = vpop.f32.mrb[0].mxu0
    %312 = vmatprep.mubr.f32.mxu0 0.0
    %313 = vmatmul.mubr.f32.gmra.mrb[0].mxu0 %v99
    %v314 = vpop.f32.mrb[0].mxu0
    %v315 = vadd.f32 %v213, %v314
    %v316 = vpop.f32.mrb[0].mxu0
    %317 = vdwg.mxu0
    %v319 = vsel %vm82, 0.0, 0
    %321 = vmatprep.subr.mxu0 0.0
    %322 = vmatpush1.msra.mxu0 %v39
    %323 = vmatprep.subr.mxu0 0.0
    %324 = vmatpush1.msra.mxu0 %v40
    %325 = vmatprep.subr.mxu0 0.0
    %326 = vmatpush1.msra.mxu0 %v41
    %327 = vmatprep.subr.mxu0 0.0
    %328 = vmatpush1.msra.mxu0 %v42
    %329 = vmatprep.subr.mxu0 0.0
    %330 = vmatpush1.msra.mxu0 0.0
    %331 = vmatprep.subr.mxu0 0.0
    %332 = vmatpush1.msra.mxu0 0.0
    %333 = vmatprep.subr.mxu0 0.0
    %334 = vmatpush1.msra.mxu0 0.0
    %335 = vmatprep.subr.mxu0 0.0
    %336 = vmatpush1.msra.mxu0 0.0
    %337 = vmatprep.subr.mxu0 0.0
    %338 = vmatpush1.msra.mxu0 0.0
    %339 = vmatprep.subr.mxu0 0.0
    %340 = vmatpush1.msra.mxu0 0.0
    %341 = vmatprep.subr.mxu0 0.0
    %342 = vmatpush1.msra.mxu0 0.0
    %343 = vmatprep.subr.mxu0 0.0
    %344 = vmatpush1.msra.mxu0 0.0
    %345 = vmatprep.subr.mxu0 0.0
    %346 = vmatpush1.msra.mxu0 0.0
    %347 = vmatprep.subr.mxu0 0.0
    %348 = vmatpush1.msra.mxu0 0.0
    %349 = vmatprep.subr.mxu0 0.0
    %350 = vmatpush1.msra.mxu0 0.0
    %351 = vmatprep.subr.mxu0 0.0
    %352 = vmatpush1.msra.mxu0 0.0
    %353 = vmatprep.subr.mxu0 0.0
    %354 = vmatpush1.msra.mxu0 0.0
    %355 = vmatprep.subr.mxu0 0.0
    %356 = vmatpush1.msra.mxu0 0.0
    %357 = vmatprep.subr.mxu0 0.0
    %358 = vmatpush1.msra.mxu0 0.0
    %359 = vmatprep.subr.mxu0 0.0
    %360 = vmatpush1.msra.mxu0 0.0
    %361 = vmatprep.subr.mxu0 0.0
    %362 = vmatpush1.msra.mxu0 0.0
    %363 = vmatprep.subr.mxu0 0.0
    %364 = vmatpush1.msra.mxu0 0.0
    %365 = vmatprep.subr.mxu0 0.0
    %366 = vmatpush1.msra.mxu0 0.0
    %367 = vmatprep.subr.mxu0 0.0
    %368 = vmatpush1.msra.mxu0 0.0
    %369 = vmatprep.subr.mxu0 0.0
    %370 = vmatpush1.msra.mxu0 0.0
    %371 = vmatprep.subr.mxu0 0.0
    %372 = vmatpush1.msra.mxu0 0.0
    %373 = vmatprep.subr.mxu0 0.0
    %374 = vmatpush1.msra.mxu0 0.0
    %375 = vmatprep.subr.mxu0 0.0
    %376 = vmatpush1.msra.mxu0 0.0
    %377 = vmatprep.subr.mxu0 0.0
    %378 = vmatpush1.msra.mxu0 0.0
    %379 = vmatprep.subr.mxu0 0.0
    %380 = vmatpush1.msra.mxu0 0.0
    %381 = vmatprep.subr.mxu0 0.0
    %382 = vmatpush1.msra.mxu0 0.0
    %383 = vmatprep.subr.mxu0 0.0
    %384 = vmatpush1.msra.mxu0 0.0
    %385 = vmatprep.mubr.f32.mxu0 0.0
    %386 = vmatmul.mubr.f32.gmra.mrb[0].mxu0 %v319
    %v387 = vpop.f32.mrb[0].mxu0
    %v388 = vadd.f32 0.0, %v387
    %v389 = vpop.f32.mrb[0].mxu0
    %390 = vdwg.mxu0
    %v391 = vadd.f32 %v201, %v388
    %v392 = vxor.u32 %v391, 2147483648
    %v393 = vmul.f32 %v392, 1.442695
    %v394 = vpow.pop %v393
    %v395 = vadd.f32 %v394, 1.0
    %v396 = vrcp.pop %v395
    %v397 = vmul.f32 1.0, %v396
    %v398 = vtanh.pop %v391
    %v399 = vmul.f32 %v397, 0.0
    %401 = vrot.lane.b32.xlu0 %v398, 64
    %v402 = vpop.permute.xlu0 %401
    %v404 = vmul.f32 %v397, %v402
    %406 = vrot.lane.b32.xlu0 %v404, 32
    %v407 = vpop.permute.xlu0 %406
    %v409 = vadd.f32 %v399, %v407
    %v410 = vtanh.pop %v409
    %412 = vrot.lane.b32.xlu0 %v410, 64
    %v413 = vpop.permute.xlu0 %412
    %v415 = vmul.f32 %v397, %v413
    %417 = vrot.lane.b32.xlu0 %v415, 32
    %v418 = vpop.permute.xlu0 %417
    %v419 = vsel %vm82, %v418, 0
    %421 = vmatprep.subr.mxu0 0.0
    %422 = vmatpush1.msra.mxu0 %v39
    %423 = vmatprep.subr.mxu0 0.0
    %424 = vmatpush1.msra.mxu0 %v40
    %425 = vmatprep.subr.mxu0 0.0
    %426 = vmatpush1.msra.mxu0 %v41
    %427 = vmatprep.subr.mxu0 0.0
    %428 = vmatpush1.msra.mxu0 %v42
    %429 = vmatprep.subr.mxu0 0.0
    %430 = vmatpush1.msra.mxu0 0.0
    %431 = vmatprep.subr.mxu0 0.0
    %432 = vmatpush1.msra.mxu0 0.0
    %433 = vmatprep.subr.mxu0 0.0
    %434 = vmatpush1.msra.mxu0 0.0
    %435 = vmatprep.subr.mxu0 0.0
    %436 = vmatpush1.msra.mxu0 0.0
    %437 = vmatprep.subr.mxu0 0.0
    %438 = vmatpush1.msra.mxu0 0.0
    %439 = vmatprep.subr.mxu0 0.0
    %440 = vmatpush1.msra.mxu0 0.0
    %441 = vmatprep.subr.mxu0 0.0
    %442 = vmatpush1.msra.mxu0 0.0
    %443 = vmatprep.subr.mxu0 0.0
    %444 = vmatpush1.msra.mxu0 0.0
    %445 = vmatprep.subr.mxu0 0.0
    %446 = vmatpush1.msra.mxu0 0.0
    %447 = vmatprep.subr.mxu0 0.0
    %448 = vmatpush1.msra.mxu0 0.0
    %449 = vmatprep.subr.mxu0 0.0
    %450 = vmatpush1.msra.mxu0 0.0
    %451 = vmatprep.subr.mxu0 0.0
    %452 = vmatpush1.msra.mxu0 0.0
    %453 = vmatprep.subr.mxu0 0.0
    %454 = vmatpush1.msra.mxu0 0.0
    %455 = vmatprep.subr.mxu0 0.0
    %456 = vmatpush1.msra.mxu0 0.0
    %457 = vmatprep.subr.mxu0 0.0
    %458 = vmatpush1.msra.mxu0 0.0
    %459 = vmatprep.subr.mxu0 0.0
    %460 = vmatpush1.msra.mxu0 0.0
    %461 = vmatprep.subr.mxu0 0.0
    %462 = vmatpush1.msra.mxu0 0.0
    %463 = vmatprep.subr.mxu0 0.0
    %464 = vmatpush1.msra.mxu0 0.0
    %465 = vmatprep.subr.mxu0 0.0
    %466 = vmatpush1.msra.mxu0 0.0
    %467 = vmatprep.subr.mxu0 0.0
    %468 = vmatpush1.msra.mxu0 0.0
    %469 = vmatprep.subr.mxu0 0.0
    %470 = vmatpush1.msra.mxu0 0.0
    %471 = vmatprep.subr.mxu0 0.0
    %472 = vmatpush1.msra.mxu0 0.0
    %473 = vmatprep.subr.mxu0 0.0
    %474 = vmatpush1.msra.mxu0 0.0
    %475 = vmatprep.subr.mxu0 0.0
    %476 = vmatpush1.msra.mxu0 0.0
    %477 = vmatprep.subr.mxu0 0.0
    %478 = vmatpush1.msra.mxu0 0.0
    %479 = vmatprep.subr.mxu0 0.0
    %480 = vmatpush1.msra.mxu0 0.0
    %481 = vmatprep.subr.mxu0 0.0
    %482 = vmatpush1.msra.mxu0 0.0
    %483 = vmatprep.subr.mxu0 0.0
    %484 = vmatpush1.msra.mxu0 0.0
    %485 = vmatprep.mubr.f32.mxu0 0.0
    %486 = vmatmul.mubr.f32.gmra.mrb[0].mxu0 %v419
    %v487 = vpop.f32.mrb[0].mxu0
    %v488 = vadd.f32 0.0, %v487
    %v489 = vpop.f32.mrb[0].mxu0
    %490 = vdwg.mxu0
    %v491 = vadd.f32 %v196, %v488
    %v492 = vxor.u32 %v491, 2147483648
    %v493 = vmul.f32 %v492, 1.442695
    %v494 = vpow.pop %v493
    %v495 = vadd.f32 %v494, 1.0
    %v496 = vrcp.pop %v495
    %v497 = vmul.f32 1.0, %v496
    %v498 = vtanh.pop %v491
    %v499 = vmul.f32 %v497, %v409
    %501 = vrot.lane.b32.xlu0 %v498, 64
    %v502 = vpop.permute.xlu0 %501
    %v504 = vmul.f32 %v497, %v502
    %506 = vrot.lane.b32.xlu0 %v504, 32
    %v507 = vpop.permute.xlu0 %506
    %v509 = vadd.f32 %v499, %v507
    %v510 = vtanh.pop %v509
    %512 = vrot.lane.b32.xlu0 %v510, 64
    %v513 = vpop.permute.xlu0 %512
    %v515 = vmul.f32 %v497, %v513
    %517 = vrot.lane.b32.xlu0 %v515, 32
    %v518 = vpop.permute.xlu0 %517
    %v519 = vsel %vm82, %v518, 0
    %521 = vmatprep.subr.mxu0 0.0
    %522 = vmatpush1.msra.mxu0 %v39
    %523 = vmatprep.subr.mxu0 0.0
    %524 = vmatpush1.msra.mxu0 %v40
    %525 = vmatprep.subr.mxu0 0.0
    %526 = vmatpush1.msra.mxu0 %v41
    %527 = vmatprep.subr.mxu0 0.0
    %528 = vmatpush1.msra.mxu0 %v42
    %529 = vmatprep.subr.mxu0 0.0
    %530 = vmatpush1.msra.mxu0 0.0
    %531 = vmatprep.subr.mxu0 0.0
    %532 = vmatpush1.msra.mxu0 0.0
    %533 = vmatprep.subr.mxu0 0.0
    %534 = vmatpush1.msra.mxu0 0.0
    %535 = vmatprep.subr.mxu0 0.0
    %536 = vmatpush1.msra.mxu0 0.0
    %537 = vmatprep.subr.mxu0 0.0
    %538 = vmatpush1.msra.mxu0 0.0
    %539 = vmatprep.subr.mxu0 0.0
    %540 = vmatpush1.msra.mxu0 0.0
    %541 = vmatprep.subr.mxu0 0.0
    %542 = vmatpush1.msra.mxu0 0.0
    %543 = vmatprep.subr.mxu0 0.0
    %544 = vmatpush1.msra.mxu0 0.0
    %545 = vmatprep.subr.mxu0 0.0
    %546 = vmatpush1.msra.mxu0 0.0
    %547 = vmatprep.subr.mxu0 0.0
    %548 = vmatpush1.msra.mxu0 0.0
    %549 = vmatprep.subr.mxu0 0.0
    %550 = vmatpush1.msra.mxu0 0.0
    %551 = vmatprep.subr.mxu0 0.0
    %552 = vmatpush1.msra.mxu0 0.0
    %553 = vmatprep.subr.mxu0 0.0
    %554 = vmatpush1.msra.mxu0 0.0
    %555 = vmatprep.subr.mxu0 0.0
    %556 = vmatpush1.msra.mxu0 0.0
    %557 = vmatprep.subr.mxu0 0.0
    %558 = vmatpush1.msra.mxu0 0.0
    %559 = vmatprep.subr.mxu0 0.0
    %560 = vmatpush1.msra.mxu0 0.0
    %561 = vmatprep.subr.mxu0 0.0
    %562 = vmatpush1.msra.mxu0 0.0
    %563 = vmatprep.subr.mxu0 0.0
    %564 = vmatpush1.msra.mxu0 0.0
    %565 = vmatprep.subr.mxu0 0.0
    %566 = vmatpush1.msra.mxu0 0.0
    %567 = vmatprep.subr.mxu0 0.0
    %568 = vmatpush1.msra.mxu0 0.0
    %569 = vmatprep.subr.mxu0 0.0
    %570 = vmatpush1.msra.mxu0 0.0
    %571 = vmatprep.subr.mxu0 0.0
    %572 = vmatpush1.msra.mxu0 0.0
    %573 = vmatprep.subr.mxu0 0.0
    %574 = vmatpush1.msra.mxu0 0.0
    %575 = vmatprep.subr.mxu0 0.0
    %576 = vmatpush1.msra.mxu0 0.0
    %577 = vmatprep.subr.mxu0 0.0
    %578 = vmatpush1.msra.mxu0 0.0
    %579 = vmatprep.subr.mxu0 0.0
    %580 = vmatpush1.msra.mxu0 0.0
    %581 = vmatprep.subr.mxu0 0.0
    %582 = vmatpush1.msra.mxu0 0.0
    %583 = vmatprep.subr.mxu0 0.0
    %584 = vmatpush1.msra.mxu0 0.0
    %585 = vmatprep.mubr.f32.mxu0 0.0
    %586 = vmatmul.mubr.f32.gmra.mrb[0].mxu0 %v519
    %v587 = vpop.f32.mrb[0].mxu0
    %v588 = vadd.f32 0.0, %v587
    %v589 = vpop.f32.mrb[0].mxu0
    %590 = vdwg.mxu0
    %v591 = vadd.f32 %v191, %v588
    %v592 = vxor.u32 %v591, 2147483648
    %v593 = vmul.f32 %v592, 1.442695
    %v594 = vpow.pop %v593
    %v595 = vadd.f32 %v594, 1.0
    %v596 = vrcp.pop %v595
    %v597 = vmul.f32 1.0, %v596
    %v598 = vtanh.pop %v591
    %v599 = vmul.f32 %v597, %v509
    %601 = vrot.lane.b32.xlu0 %v598, 64
    %v602 = vpop.permute.xlu0 %601
    %v604 = vmul.f32 %v597, %v602
    %606 = vrot.lane.b32.xlu0 %v604, 32
    %v607 = vpop.permute.xlu0 %606
    %v609 = vadd.f32 %v599, %v607
    %v610 = vtanh.pop %v609
    %612 = vrot.lane.b32.xlu0 %v610, 64
    %v613 = vpop.permute.xlu0 %612
    %v615 = vmul.f32 %v597, %v613
    %617 = vrot.lane.b32.xlu0 %v615, 32
    %v618 = vpop.permute.xlu0 %617
    %v619 = vsel %vm82, %v618, 0
    %621 = vmatprep.subr.mxu0 0.0
    %622 = vmatpush1.msra.mxu0 %v39
    %623 = vmatprep.subr.mxu0 0.0
    %624 = vmatpush1.msra.mxu0 %v40
    %625 = vmatprep.subr.mxu0 0.0
    %626 = vmatpush1.msra.mxu0 %v41
    %627 = vmatprep.subr.mxu0 0.0
    %628 = vmatpush1.msra.mxu0 %v42
    %629 = vmatprep.subr.mxu0 0.0
    %630 = vmatpush1.msra.mxu0 0.0
    %631 = vmatprep.subr.mxu0 0.0
    %632 = vmatpush1.msra.mxu0 0.0
    %633 = vmatprep.subr.mxu0 0.0
    %634 = vmatpush1.msra.mxu0 0.0
    %635 = vmatprep.subr.mxu0 0.0
    %636 = vmatpush1.msra.mxu0 0.0
    %637 = vmatprep.subr.mxu0 0.0
    %638 = vmatpush1.msra.mxu0 0.0
    %639 = vmatprep.subr.mxu0 0.0
    %640 = vmatpush1.msra.mxu0 0.0
    %641 = vmatprep.subr.mxu0 0.0
    %642 = vmatpush1.msra.mxu0 0.0
    %643 = vmatprep.subr.mxu0 0.0
    %644 = vmatpush1.msra.mxu0 0.0
    %645 = vmatprep.subr.mxu0 0.0
    %646 = vmatpush1.msra.mxu0 0.0
    %647 = vmatprep.subr.mxu0 0.0
    %648 = vmatpush1.msra.mxu0 0.0
    %649 = vmatprep.subr.mxu0 0.0
    %650 = vmatpush1.msra.mxu0 0.0
    %651 = vmatprep.subr.mxu0 0.0
    %652 = vmatpush1.msra.mxu0 0.0
    %653 = vmatprep.subr.mxu0 0.0
    %654 = vmatpush1.msra.mxu0 0.0
    %655 = vmatprep.subr.mxu0 0.0
    %656 = vmatpush1.msra.mxu0 0.0
    %657 = vmatprep.subr.mxu0 0.0
    %658 = vmatpush1.msra.mxu0 0.0
    %659 = vmatprep.subr.mxu0 0.0
    %660 = vmatpush1.msra.mxu0 0.0
    %661 = vmatprep.subr.mxu0 0.0
    %662 = vmatpush1.msra.mxu0 0.0
    %663 = vmatprep.subr.mxu0 0.0
    %664 = vmatpush1.msra.mxu0 0.0
    %665 = vmatprep.subr.mxu0 0.0
    %666 = vmatpush1.msra.mxu0 0.0
    %667 = vmatprep.subr.mxu0 0.0
    %668 = vmatpush1.msra.mxu0 0.0
    %669 = vmatprep.subr.mxu0 0.0
    %670 = vmatpush1.msra.mxu0 0.0
    %671 = vmatprep.subr.mxu0 0.0
    %672 = vmatpush1.msra.mxu0 0.0
    %673 = vmatprep.subr.mxu0 0.0
    %674 = vmatpush1.msra.mxu0 0.0
    %675 = vmatprep.subr.mxu0 0.0
    %676 = vmatpush1.msra.mxu0 0.0
    %677 = vmatprep.subr.mxu0 0.0
    %678 = vmatpush1.msra.mxu0 0.0
    %679 = vmatprep.subr.mxu0 0.0
    %680 = vmatpush1.msra.mxu0 0.0
    %681 = vmatprep.subr.mxu0 0.0
    %682 = vmatpush1.msra.mxu0 0.0
    %683 = vmatprep.subr.mxu0 0.0
    %684 = vmatpush1.msra.mxu0 0.0
    %685 = vmatprep.mubr.f32.mxu0 0.0
    %686 = vmatmul.mubr.f32.gmra.mrb[0].mxu0 %v619
    %v687 = vpop.f32.mrb[0].mxu0
    %v688 = vadd.f32 0.0, %v687
    %v689 = vpop.f32.mrb[0].mxu0
    %690 = vdwg.mxu0
    %v691 = vadd.f32 %v186, %v688
    %v692 = vxor.u32 %v691, 2147483648
    %v693 = vmul.f32 %v692, 1.442695
    %v694 = vpow.pop %v693
    %v695 = vadd.f32 %v694, 1.0
    %v696 = vrcp.pop %v695
    %v697 = vmul.f32 1.0, %v696
    %v698 = vtanh.pop %v691
    %v699 = vmul.f32 %v697, %v609
    %701 = vrot.lane.b32.xlu0 %v698, 64
    %v702 = vpop.permute.xlu0 %701
    %v704 = vmul.f32 %v697, %v702
    %706 = vrot.lane.b32.xlu0 %v704, 32
    %v707 = vpop.permute.xlu0 %706
    %v709 = vadd.f32 %v699, %v707
    %v710 = vtanh.pop %v709
    %712 = vrot.lane.b32.xlu0 %v710, 64
    %v713 = vpop.permute.xlu0 %712
    %v715 = vmul.f32 %v697, %v713
    %717 = vrot.lane.b32.xlu0 %v715, 32
    %v718 = vpop.permute.xlu0 %717
    %v719 = vsel %vm82, %v718, 0
    %721 = vmatprep.subr.mxu0 0.0
    %722 = vmatpush1.msra.mxu0 %v39
    %723 = vmatprep.subr.mxu0 0.0
    %724 = vmatpush1.msra.mxu0 %v40
    %725 = vmatprep.subr.mxu0 0.0
    %726 = vmatpush1.msra.mxu0 %v41
    %727 = vmatprep.subr.mxu0 0.0
    %728 = vmatpush1.msra.mxu0 %v42
    %729 = vmatprep.subr.mxu0 0.0
    %730 = vmatpush1.msra.mxu0 0.0
    %731 = vmatprep.subr.mxu0 0.0
    %732 = vmatpush1.msra.mxu0 0.0
    %733 = vmatprep.subr.mxu0 0.0
    %734 = vmatpush1.msra.mxu0 0.0
    %735 = vmatprep.subr.mxu0 0.0
    %736 = vmatpush1.msra.mxu0 0.0
    %737 = vmatprep.subr.mxu0 0.0
    %738 = vmatpush1.msra.mxu0 0.0
    %739 = vmatprep.subr.mxu0 0.0
    %740 = vmatpush1.msra.mxu0 0.0
    %741 = vmatprep.subr.mxu0 0.0
    %742 = vmatpush1.msra.mxu0 0.0
    %743 = vmatprep.subr.mxu0 0.0
    %744 = vmatpush1.msra.mxu0 0.0
    %745 = vmatprep.subr.mxu0 0.0
    %746 = vmatpush1.msra.mxu0 0.0
    %747 = vmatprep.subr.mxu0 0.0
    %748 = vmatpush1.msra.mxu0 0.0
    %749 = vmatprep.subr.mxu0 0.0
    %750 = vmatpush1.msra.mxu0 0.0
    %751 = vmatprep.subr.mxu0 0.0
    %752 = vmatpush1.msra.mxu0 0.0
    %753 = vmatprep.subr.mxu0 0.0
    %754 = vmatpush1.msra.mxu0 0.0
    %755 = vmatprep.subr.mxu0 0.0
    %756 = vmatpush1.msra.mxu0 0.0
    %757 = vmatprep.subr.mxu0 0.0
    %758 = vmatpush1.msra.mxu0 0.0
    %759 = vmatprep.subr.mxu0 0.0
    %760 = vmatpush1.msra.mxu0 0.0
    %761 = vmatprep.subr.mxu0 0.0
    %762 = vmatpush1.msra.mxu0 0.0
    %763 = vmatprep.subr.mxu0 0.0
    %764 = vmatpush1.msra.mxu0 0.0
    %765 = vmatprep.subr.mxu0 0.0
    %766 = vmatpush1.msra.mxu0 0.0
    %767 = vmatprep.subr.mxu0 0.0
    %768 = vmatpush1.msra.mxu0 0.0
    %769 = vmatprep.subr.mxu0 0.0
    %770 = vmatpush1.msra.mxu0 0.0
    %771 = vmatprep.subr.mxu0 0.0
    %772 = vmatpush1.msra.mxu0 0.0
    %773 = vmatprep.subr.mxu0 0.0
    %774 = vmatpush1.msra.mxu0 0.0
    %775 = vmatprep.subr.mxu0 0.0
    %776 = vmatpush1.msra.mxu0 0.0
    %777 = vmatprep.subr.mxu0 0.0
    %778 = vmatpush1.msra.mxu0 0.0
    %779 = vmatprep.subr.mxu0 0.0
    %780 = vmatpush1.msra.mxu0 0.0
    %781 = vmatprep.subr.mxu0 0.0
    %782 = vmatpush1.msra.mxu0 0.0
    %783 = vmatprep.subr.mxu0 0.0
    %784 = vmatpush1.msra.mxu0 0.0
    %785 = vmatprep.mubr.f32.mxu0 0.0
    %786 = vmatmul.mubr.f32.gmra.mrb[0].mxu0 %v719
    %v787 = vpop.f32.mrb[0].mxu0
    %v788 = vadd.f32 0.0, %v787
    %v789 = vpop.f32.mrb[0].mxu0
    %790 = vdwg.mxu0
    %v791 = vadd.f32 %v181, %v788
    %v792 = vxor.u32 %v791, 2147483648
    %v793 = vmul.f32 %v792, 1.442695
    %v794 = vpow.pop %v793
    %v795 = vadd.f32 %v794, 1.0
    %v796 = vrcp.pop %v795
    %v797 = vmul.f32 1.0, %v796
    %v798 = vtanh.pop %v791
    %v799 = vmul.f32 %v797, %v709
    %801 = vrot.lane.b32.xlu0 %v798, 64
    %v802 = vpop.permute.xlu0 %801
    %v804 = vmul.f32 %v797, %v802
    %806 = vrot.lane.b32.xlu0 %v804, 32
    %v807 = vpop.permute.xlu0 %806
    %v809 = vadd.f32 %v799, %v807
    %v810 = vtanh.pop %v809
    %812 = vrot.lane.b32.xlu0 %v810, 64
    %v813 = vpop.permute.xlu0 %812
    %v815 = vmul.f32 %v797, %v813
    %817 = vrot.lane.b32.xlu0 %v815, 32
    %v818 = vpop.permute.xlu0 %817
    %v819 = vsel %vm82, %v818, 0
    %821 = vmatprep.subr.mxu0 0.0
    %822 = vmatpush1.msra.mxu0 %v39
    %823 = vmatprep.subr.mxu0 0.0
    %824 = vmatpush1.msra.mxu0 %v40
    %825 = vmatprep.subr.mxu0 0.0
    %826 = vmatpush1.msra.mxu0 %v41
    %827 = vmatprep.subr.mxu0 0.0
    %828 = vmatpush1.msra.mxu0 %v42
    %829 = vmatprep.subr.mxu0 0.0
    %830 = vmatpush1.msra.mxu0 0.0
    %831 = vmatprep.subr.mxu0 0.0
    %832 = vmatpush1.msra.mxu0 0.0
    %833 = vmatprep.subr.mxu0 0.0
    %834 = vmatpush1.msra.mxu0 0.0
    %835 = vmatprep.subr.mxu0 0.0
    %836 = vmatpush1.msra.mxu0 0.0
    %837 = vmatprep.subr.mxu0 0.0
    %838 = vmatpush1.msra.mxu0 0.0
    %839 = vmatprep.subr.mxu0 0.0
    %840 = vmatpush1.msra.mxu0 0.0
    %841 = vmatprep.subr.mxu0 0.0
    %842 = vmatpush1.msra.mxu0 0.0
    %843 = vmatprep.subr.mxu0 0.0
    %844 = vmatpush1.msra.mxu0 0.0
    %845 = vmatprep.subr.mxu0 0.0
    %846 = vmatpush1.msra.mxu0 0.0
    %847 = vmatprep.subr.mxu0 0.0
    %848 = vmatpush1.msra.mxu0 0.0
    %849 = vmatprep.subr.mxu0 0.0
    %850 = vmatpush1.msra.mxu0 0.0
    %851 = vmatprep.subr.mxu0 0.0
    %852 = vmatpush1.msra.mxu0 0.0
    %853 = vmatprep.subr.mxu0 0.0
    %854 = vmatpush1.msra.mxu0 0.0
    %855 = vmatprep.subr.mxu0 0.0
    %856 = vmatpush1.msra.mxu0 0.0
    %857 = vmatprep.subr.mxu0 0.0
    %858 = vmatpush1.msra.mxu0 0.0
    %859 = vmatprep.subr.mxu0 0.0
    %860 = vmatpush1.msra.mxu0 0.0
    %861 = vmatprep.subr.mxu0 0.0
    %862 = vmatpush1.msra.mxu0 0.0
    %863 = vmatprep.subr.mxu0 0.0
    %864 = vmatpush1.msra.mxu0 0.0
    %865 = vmatprep.subr.mxu0 0.0
    %866 = vmatpush1.msra.mxu0 0.0
    %867 = vmatprep.subr.mxu0 0.0
    %868 = vmatpush1.msra.mxu0 0.0
    %869 = vmatprep.subr.mxu0 0.0
    %870 = vmatpush1.msra.mxu0 0.0
    %871 = vmatprep.subr.mxu0 0.0
    %872 = vmatpush1.msra.mxu0 0.0
    %873 = vmatprep.subr.mxu0 0.0
    %874 = vmatpush1.msra.mxu0 0.0
    %875 = vmatprep.subr.mxu0 0.0
    %876 = vmatpush1.msra.mxu0 0.0
    %877 = vmatprep.subr.mxu0 0.0
    %878 = vmatpush1.msra.mxu0 0.0
    %879 = vmatprep.subr.mxu0 0.0
    %880 = vmatpush1.msra.mxu0 0.0
    %881 = vmatprep.subr.mxu0 0.0
    %882 = vmatpush1.msra.mxu0 0.0
    %883 = vmatprep.subr.mxu0 0.0
    %884 = vmatpush1.msra.mxu0 0.0
    %885 = vmatprep.mubr.f32.mxu0 0.0
    %886 = vmatmul.mubr.f32.gmra.mrb[0].mxu0 %v819
    %v887 = vpop.f32.mrb[0].mxu0
    %v888 = vadd.f32 0.0, %v887
    %v889 = vpop.f32.mrb[0].mxu0
    %890 = vdwg.mxu0
    %v891 = vadd.f32 %v176, %v888
    %v892 = vxor.u32 %v891, 2147483648
    %v893 = vmul.f32 %v892, 1.442695
    %v894 = vpow.pop %v893
    %v895 = vadd.f32 %v894, 1.0
    %v896 = vrcp.pop %v895
    %v897 = vmul.f32 1.0, %v896
    %v898 = vtanh.pop %v891
    %v899 = vmul.f32 %v897, %v809
    %901 = vrot.lane.b32.xlu0 %v898, 64
    %v902 = vpop.permute.xlu0 %901
    %v904 = vmul.f32 %v897, %v902
    %906 = vrot.lane.b32.xlu0 %v904, 32
    %v907 = vpop.permute.xlu0 %906
    %v909 = vadd.f32 %v899, %v907
    %v910 = vtanh.pop %v909
    %912 = vrot.lane.b32.xlu0 %v910, 64
    %v913 = vpop.permute.xlu0 %912
    %v915 = vmul.f32 %v897, %v913
    %917 = vrot.lane.b32.xlu0 %v915, 32
    %v918 = vpop.permute.xlu0 %917
    %v919 = vsel %vm82, %v918, 0
    %921 = vmatprep.subr.mxu0 0.0
    %922 = vmatpush1.msra.mxu0 %v39
    %923 = vmatprep.subr.mxu0 0.0
    %924 = vmatpush1.msra.mxu0 %v40
    %925 = vmatprep.subr.mxu0 0.0
    %926 = vmatpush1.msra.mxu0 %v41
    %927 = vmatprep.subr.mxu0 0.0
    %928 = vmatpush1.msra.mxu0 %v42
    %929 = vmatprep.subr.mxu0 0.0
    %930 = vmatpush1.msra.mxu0 0.0
    %931 = vmatprep.subr.mxu0 0.0
    %932 = vmatpush1.msra.mxu0 0.0
    %933 = vmatprep.subr.mxu0 0.0
    %934 = vmatpush1.msra.mxu0 0.0
    %935 = vmatprep.subr.mxu0 0.0
    %936 = vmatpush1.msra.mxu0 0.0
    %937 = vmatprep.subr.mxu0 0.0
    %938 = vmatpush1.msra.mxu0 0.0
    %939 = vmatprep.subr.mxu0 0.0
    %940 = vmatpush1.msra.mxu0 0.0
    %941 = vmatprep.subr.mxu0 0.0
    %942 = vmatpush1.msra.mxu0 0.0
    %943 = vmatprep.subr.mxu0 0.0
    %944 = vmatpush1.msra.mxu0 0.0
    %945 = vmatprep.subr.mxu0 0.0
    %946 = vmatpush1.msra.mxu0 0.0
    %947 = vmatprep.subr.mxu0 0.0
    %948 = vmatpush1.msra.mxu0 0.0
    %949 = vmatprep.subr.mxu0 0.0
    %950 = vmatpush1.msra.mxu0 0.0
    %951 = vmatprep.subr.mxu0 0.0
    %952 = vmatpush1.msra.mxu0 0.0
    %953 = vmatprep.subr.mxu0 0.0
    %954 = vmatpush1.msra.mxu0 0.0
    %955 = vmatprep.subr.mxu0 0.0
    %956 = vmatpush1.msra.mxu0 0.0
    %957 = vmatprep.subr.mxu0 0.0
    %958 = vmatpush1.msra.mxu0 0.0
    %959 = vmatprep.subr.mxu0 0.0
    %960 = vmatpush1.msra.mxu0 0.0
    %961 = vmatprep.subr.mxu0 0.0
    %962 = vmatpush1.msra.mxu0 0.0
    %963 = vmatprep.subr.mxu0 0.0
    %964 = vmatpush1.msra.mxu0 0.0
    %965 = vmatprep.subr.mxu0 0.0
    %966 = vmatpush1.msra.mxu0 0.0
    %967 = vmatprep.subr.mxu0 0.0
    %968 = vmatpush1.msra.mxu0 0.0
    %969 = vmatprep.subr.mxu0 0.0
    %970 = vmatpush1.msra.mxu0 0.0
    %971 = vmatprep.subr.mxu0 0.0
    %972 = vmatpush1.msra.mxu0 0.0
    %973 = vmatprep.subr.mxu0 0.0
    %974 = vmatpush1.msra.mxu0 0.0
    %975 = vmatprep.subr.mxu0 0.0
    %976 = vmatpush1.msra.mxu0 0.0
    %977 = vmatprep.subr.mxu0 0.0
    %978 = vmatpush1.msra.mxu0 0.0
    %979 = vmatprep.subr.mxu0 0.0
    %980 = vmatpush1.msra.mxu0 0.0
    %981 = vmatprep.subr.mxu0 0.0
    %982 = vmatpush1.msra.mxu0 0.0
    %983 = vmatprep.subr.mxu0 0.0
    %984 = vmatpush1.msra.mxu0 0.0
    %985 = vmatprep.mubr.f32.mxu0 0.0
    %986 = vmatmul.mubr.f32.gmra.mrb[0].mxu0 %v919
    %v987 = vpop.f32.mrb[0].mxu0
    %v988 = vadd.f32 0.0, %v987
    %v989 = vpop.f32.mrb[0].mxu0
    %990 = vdwg.mxu0
    %v991 = vadd.f32 %v171, %v988
    %v992 = vxor.u32 %v991, 2147483648
    %v993 = vmul.f32 %v992, 1.442695
    %v994 = vpow.pop %v993
    %v995 = vadd.f32 %v994, 1.0
    %v996 = vrcp.pop %v995
    %v997 = vmul.f32 1.0, %v996
    %v998 = vtanh.pop %v991
    %v999 = vmul.f32 %v997, %v909
    %1001 = vrot.lane.b32.xlu0 %v998, 64
    %v1002 = vpop.permute.xlu0 %1001
    %v1004 = vmul.f32 %v997, %v1002
    %1006 = vrot.lane.b32.xlu0 %v1004, 32
    %v1007 = vpop.permute.xlu0 %1006
    %v1009 = vadd.f32 %v999, %v1007
    %v1010 = vtanh.pop %v1009
    %1012 = vrot.lane.b32.xlu0 %v1010, 64
    %v1013 = vpop.permute.xlu0 %1012
    %v1015 = vmul.f32 %v997, %v1013
    %1017 = vrot.lane.b32.xlu0 %v1015, 32
    %v1018 = vpop.permute.xlu0 %1017
    %v1019 = vsel %vm82, %v1018, 0
    %1021 = vmatprep.subr.mxu0 0.0
    %1022 = vmatpush1.msra.mxu0 %v43
    %1023 = vmatprep.subr.mxu0 0.0
    %1024 = vmatpush1.msra.mxu0 %v44
    %1025 = vmatprep.subr.mxu0 0.0
    %1026 = vmatpush1.msra.mxu0 %v45
    %1027 = vmatprep.subr.mxu0 0.0
    %1028 = vmatpush1.msra.mxu0 %v46
    %1029 = vmatprep.subr.mxu0 0.0
    %1030 = vmatpush1.msra.mxu0 0.0
    %1031 = vmatprep.subr.mxu0 0.0
    %1032 = vmatpush1.msra.mxu0 0.0
    %1033 = vmatprep.subr.mxu0 0.0
    %1034 = vmatpush1.msra.mxu0 0.0
    %1035 = vmatprep.subr.mxu0 0.0
    %1036 = vmatpush1.msra.mxu0 0.0
    %1037 = vmatprep.subr.mxu0 0.0
    %1038 = vmatpush1.msra.mxu0 0.0
    %1039 = vmatprep.subr.mxu0 0.0
    %1040 = vmatpush1.msra.mxu0 0.0
    %1041 = vmatprep.subr.mxu0 0.0
    %1042 = vmatpush1.msra.mxu0 0.0
    %1043 = vmatprep.subr.mxu0 0.0
    %1044 = vmatpush1.msra.mxu0 0.0
    %1045 = vmatprep.subr.mxu0 0.0
    %1046 = vmatpush1.msra.mxu0 0.0
    %1047 = vmatprep.subr.mxu0 0.0
    %1048 = vmatpush1.msra.mxu0 0.0
    %1049 = vmatprep.subr.mxu0 0.0
    %1050 = vmatpush1.msra.mxu0 0.0
    %1051 = vmatprep.subr.mxu0 0.0
    %1052 = vmatpush1.msra.mxu0 0.0
    %1053 = vmatprep.subr.mxu0 0.0
    %1054 = vmatpush1.msra.mxu0 0.0
    %1055 = vmatprep.subr.mxu0 0.0
    %1056 = vmatpush1.msra.mxu0 0.0
    %1057 = vmatprep.subr.mxu0 0.0
    %1058 = vmatpush1.msra.mxu0 0.0
    %1059 = vmatprep.subr.mxu0 0.0
    %1060 = vmatpush1.msra.mxu0 0.0
    %1061 = vmatprep.subr.mxu0 0.0
    %1062 = vmatpush1.msra.mxu0 0.0
    %1063 = vmatprep.subr.mxu0 0.0
    %1064 = vmatpush1.msra.mxu0 0.0
    %1065 = vmatprep.subr.mxu0 0.0
    %1066 = vmatpush1.msra.mxu0 0.0
    %1067 = vmatprep.subr.mxu0 0.0
    %1068 = vmatpush1.msra.mxu0 0.0
    %1069 = vmatprep.subr.mxu0 0.0
    %1070 = vmatpush1.msra.mxu0 0.0
    %1071 = vmatprep.subr.mxu0 0.0
    %1072 = vmatpush1.msra.mxu0 0.0
    %1073 = vmatprep.subr.mxu0 0.0
    %1074 = vmatpush1.msra.mxu0 0.0
    %1075 = vmatprep.subr.mxu0 0.0
    %1076 = vmatpush1.msra.mxu0 0.0
    %1077 = vmatprep.subr.mxu0 0.0
    %1078 = vmatpush1.msra.mxu0 0.0
    %1079 = vmatprep.subr.mxu0 0.0
    %1080 = vmatpush1.msra.mxu0 0.0
    %1081 = vmatprep.subr.mxu0 0.0
    %1082 = vmatpush1.msra.mxu0 0.0
    %1083 = vmatprep.subr.mxu0 0.0
    %1084 = vmatpush1.msra.mxu0 0.0
    %1085 = vmatprep.mubr.f32.mxu0 0.0
    %1086 = vmatmul.mubr.f32.gmra.mrb[0].mxu0 %v1019
    %v1087 = vpop.f32.mrb[0].mxu0
    %v1088 = vadd.f32 0.0, %v1087
    %v1089 = vpop.f32.mrb[0].mxu0
    %1090 = vdwg.mxu0
    %v1091 = vadd.f32 %v285, %v1088
    %v1092 = vxor.u32 %v1091, 2147483648
    %v1093 = vmul.f32 %v1092, 1.442695
    %v1094 = vpow.pop %v1093
    %v1095 = vadd.f32 %v1094, 1.0
    %v1096 = vrcp.pop %v1095
    %v1097 = vmul.f32 1.0, %v1096
    %v1098 = vtanh.pop %v1091
    %v1099 = vmul.f32 %v1097, %v1009
    %1101 = vrot.lane.b32.xlu0 %v1098, 64
    %v1102 = vpop.permute.xlu0 %1101
    %v1104 = vmul.f32 %v1097, %v1102
    %1106 = vrot.lane.b32.xlu0 %v1104, 32
    %v1107 = vpop.permute.xlu0 %1106
    %v1109 = vadd.f32 %v1099, %v1107
    %v1110 = vtanh.pop %v1109
    %1112 = vrot.lane.b32.xlu0 %v1110, 64
    %v1113 = vpop.permute.xlu0 %1112
    %v1115 = vmul.f32 %v1097, %v1113
    %1117 = vrot.lane.b32.xlu0 %v1115, 32
    %v1118 = vpop.permute.xlu0 %1117
    %1120 = vst.msk [vmem:[#allocation2] sm:$0xff] %vm82, %v1118
    %v1121 = vsel %vm82, %v1118, 0
    %1123 = vmatprep.subr.mxu0 0.0
    %1124 = vmatpush1.msra.mxu0 %v43
    %1125 = vmatprep.subr.mxu0 0.0
    %1126 = vmatpush1.msra.mxu0 %v44
    %1127 = vmatprep.subr.mxu0 0.0
    %1128 = vmatpush1.msra.mxu0 %v45
    %1129 = vmatprep.subr.mxu0 0.0
    %1130 = vmatpush1.msra.mxu0 %v46
    %1131 = vmatprep.subr.mxu0 0.0
    %1132 = vmatpush1.msra.mxu0 0.0
    %1133 = vmatprep.subr.mxu0 0.0
    %1134 = vmatpush1.msra.mxu0 0.0
    %1135 = vmatprep.subr.mxu0 0.0
    %1136 = vmatpush1.msra.mxu0 0.0
    %1137 = vmatprep.subr.mxu0 0.0
    %1138 = vmatpush1.msra.mxu0 0.0
    %1139 = vmatprep.subr.mxu0 0.0
    %1140 = vmatpush1.msra.mxu0 0.0
    %1141 = vmatprep.subr.mxu0 0.0
    %1142 = vmatpush1.msra.mxu0 0.0
    %1143 = vmatprep.subr.mxu0 0.0
    %1144 = vmatpush1.msra.mxu0 0.0
    %1145 = vmatprep.subr.mxu0 0.0
    %1146 = vmatpush1.msra.mxu0 0.0
    %1147 = vmatprep.subr.mxu0 0.0
    %1148 = vmatpush1.msra.mxu0 0.0
    %1149 = vmatprep.subr.mxu0 0.0
    %1150 = vmatpush1.msra.mxu0 0.0
    %1151 = vmatprep.subr.mxu0 0.0
    %1152 = vmatpush1.msra.mxu0 0.0
    %1153 = vmatprep.subr.mxu0 0.0
    %1154 = vmatpush1.msra.mxu0 0.0
    %1155 = vmatprep.subr.mxu0 0.0
    %1156 = vmatpush1.msra.mxu0 0.0
    %1157 = vmatprep.subr.mxu0 0.0
    %1158 = vmatpush1.msra.mxu0 0.0
    %1159 = vmatprep.subr.mxu0 0.0
    %1160 = vmatpush1.msra.mxu0 0.0
    %1161 = vmatprep.subr.mxu0 0.0
    %1162 = vmatpush1.msra.mxu0 0.0
    %1163 = vmatprep.subr.mxu0 0.0
    %1164 = vmatpush1.msra.mxu0 0.0
    %1165 = vmatprep.subr.mxu0 0.0
    %1166 = vmatpush1.msra.mxu0 0.0
    %1167 = vmatprep.subr.mxu0 0.0
    %1168 = vmatpush1.msra.mxu0 0.0
    %1169 = vmatprep.subr.mxu0 0.0
    %1170 = vmatpush1.msra.mxu0 0.0
    %1171 = vmatprep.subr.mxu0 0.0
    %1172 = vmatpush1.msra.mxu0 0.0
    %1173 = vmatprep.subr.mxu0 0.0
    %1174 = vmatpush1.msra.mxu0 0.0
    %1175 = vmatprep.subr.mxu0 0.0
    %1176 = vmatpush1.msra.mxu0 0.0
    %1177 = vmatprep.subr.mxu0 0.0
    %1178 = vmatpush1.msra.mxu0 0.0
    %1179 = vmatprep.subr.mxu0 0.0
    %1180 = vmatpush1.msra.mxu0 0.0
    %1181 = vmatprep.subr.mxu0 0.0
    %1182 = vmatpush1.msra.mxu0 0.0
    %1183 = vmatprep.subr.mxu0 0.0
    %1184 = vmatpush1.msra.mxu0 0.0
    %1185 = vmatprep.subr.mxu0 0.0
    %1186 = vmatpush1.msra.mxu0 0.0
    %1187 = vmatprep.mubr.f32.mxu0 0.0
    %1188 = vmatmul.mubr.f32.gmra.mrb[0].mxu0 %v1121
    %v1189 = vpop.f32.mrb[0].mxu0
    %v1190 = vadd.f32 0.0, %v1189
    %v1191 = vpop.f32.mrb[0].mxu0
    %1192 = vdwg.mxu0
    %v1193 = vadd.f32 %v290, %v1190
    %v1194 = vxor.u32 %v1193, 2147483648
    %v1195 = vmul.f32 %v1194, 1.442695
    %v1196 = vpow.pop %v1195
    %v1197 = vadd.f32 %v1196, 1.0
    %v1198 = vrcp.pop %v1197
    %v1199 = vmul.f32 1.0, %v1198
    %v1200 = vtanh.pop %v1193
    %v1201 = vmul.f32 %v1199, %v1109
    %1203 = vrot.lane.b32.xlu0 %v1200, 64
    %v1204 = vpop.permute.xlu0 %1203
    %v1206 = vmul.f32 %v1199, %v1204
    %1208 = vrot.lane.b32.xlu0 %v1206, 32
    %v1209 = vpop.permute.xlu0 %1208
    %v1211 = vadd.f32 %v1201, %v1209
    %v1212 = vtanh.pop %v1211
    %1214 = vrot.lane.b32.xlu0 %v1212, 64
    %v1215 = vpop.permute.xlu0 %1214
    %v1217 = vmul.f32 %v1199, %v1215
    %1219 = vrot.lane.b32.xlu0 %v1217, 32
    %v1220 = vpop.permute.xlu0 %1219
    %1222 = vst.msk [vmem:[#allocation2 + $0x8] sm:$0xff] %vm82, %v1220
    %v1223 = vsel %vm82, %v1220, 0
    %1225 = vmatprep.subr.mxu0 0.0
    %1226 = vmatpush1.msra.mxu0 %v43
    %1227 = vmatprep.subr.mxu0 0.0
    %1228 = vmatpush1.msra.mxu0 %v44
    %1229 = vmatprep.subr.mxu0 0.0
    %1230 = vmatpush1.msra.mxu0 %v45
    %1231 = vmatprep.subr.mxu0 0.0
    %1232 = vmatpush1.msra.mxu0 %v46
    %1233 = vmatprep.subr.mxu0 0.0
    %1234 = vmatpush1.msra.mxu0 0.0
    %1235 = vmatprep.subr.mxu0 0.0
    %1236 = vmatpush1.msra.mxu0 0.0
    %1237 = vmatprep.subr.mxu0 0.0
    %1238 = vmatpush1.msra.mxu0 0.0
    %1239 = vmatprep.subr.mxu0 0.0
    %1240 = vmatpush1.msra.mxu0 0.0
    %1241 = vmatprep.subr.mxu0 0.0
    %1242 = vmatpush1.msra.mxu0 0.0
    %1243 = vmatprep.subr.mxu0 0.0
    %1244 = vmatpush1.msra.mxu0 0.0
    %1245 = vmatprep.subr.mxu0 0.0
    %1246 = vmatpush1.msra.mxu0 0.0
    %1247 = vmatprep.subr.mxu0 0.0
    %1248 = vmatpush1.msra.mxu0 0.0
    %1249 = vmatprep.subr.mxu0 0.0
    %1250 = vmatpush1.msra.mxu0 0.0
    %1251 = vmatprep.subr.mxu0 0.0
    %1252 = vmatpush1.msra.mxu0 0.0
    %1253 = vmatprep.subr.mxu0 0.0
    %1254 = vmatpush1.msra.mxu0 0.0
    %1255 = vmatprep.subr.mxu0 0.0
    %1256 = vmatpush1.msra.mxu0 0.0
    %1257 = vmatprep.subr.mxu0 0.0
    %1258 = vmatpush1.msra.mxu0 0.0
    %1259 = vmatprep.subr.mxu0 0.0
    %1260 = vmatpush1.msra.mxu0 0.0
    %1261 = vmatprep.subr.mxu0 0.0
    %1262 = vmatpush1.msra.mxu0 0.0
    %1263 = vmatprep.subr.mxu0 0.0
    %1264 = vmatpush1.msra.mxu0 0.0
    %1265 = vmatprep.subr.mxu0 0.0
    %1266 = vmatpush1.msra.mxu0 0.0
    %1267 = vmatprep.subr.mxu0 0.0
    %1268 = vmatpush1.msra.mxu0 0.0
    %1269 = vmatprep.subr.mxu0 0.0
    %1270 = vmatpush1.msra.mxu0 0.0
    %1271 = vmatprep.subr.mxu0 0.0
    %1272 = vmatpush1.msra.mxu0 0.0
    %1273 = vmatprep.subr.mxu0 0.0
    %1274 = vmatpush1.msra.mxu0 0.0
    %1275 = vmatprep.subr.mxu0 0.0
    %1276 = vmatpush1.msra.mxu0 0.0
    %1277 = vmatprep.subr.mxu0 0.0
    %1278 = vmatpush1.msra.mxu0 0.0
    %1279 = vmatprep.subr.mxu0 0.0
    %1280 = vmatpush1.msra.mxu0 0.0
    %1281 = vmatprep.subr.mxu0 0.0
    %1282 = vmatpush1.msra.mxu0 0.0
    %1283 = vmatprep.subr.mxu0 0.0
    %1284 = vmatpush1.msra.mxu0 0.0
    %1285 = vmatprep.subr.mxu0 0.0
    %1286 = vmatpush1.msra.mxu0 0.0
    %1287 = vmatprep.subr.mxu0 0.0
    %1288 = vmatpush1.msra.mxu0 0.0
    %1289 = vmatprep.mubr.f32.mxu0 0.0
    %1290 = vmatmul.mubr.f32.gmra.mrb[0].mxu0 %v1223
    %v1291 = vpop.f32.mrb[0].mxu0
    %v1292 = vadd.f32 0.0, %v1291
    %v1293 = vpop.f32.mrb[0].mxu0
    %1294 = vdwg.mxu0
    %v1295 = vadd.f32 %v295, %v1292
    %v1296 = vxor.u32 %v1295, 2147483648
    %v1297 = vmul.f32 %v1296, 1.442695
    %v1298 = vpow.pop %v1297
    %v1299 = vadd.f32 %v1298, 1.0
    %v1300 = vrcp.pop %v1299
    %v1301 = vmul.f32 1.0, %v1300
    %v1302 = vtanh.pop %v1295
    %v1303 = vmul.f32 %v1301, %v1211
    %1305 = vrot.lane.b32.xlu0 %v1302, 64
    %v1306 = vpop.permute.xlu0 %1305
    %v1308 = vmul.f32 %v1301, %v1306
    %1310 = vrot.lane.b32.xlu0 %v1308, 32
    %v1311 = vpop.permute.xlu0 %1310
    %v1313 = vadd.f32 %v1303, %v1311
    %v1314 = vtanh.pop %v1313
    %1316 = vrot.lane.b32.xlu0 %v1314, 64
    %v1317 = vpop.permute.xlu0 %1316
    %v1319 = vmul.f32 %v1301, %v1317
    %1321 = vrot.lane.b32.xlu0 %v1319, 32
    %v1322 = vpop.permute.xlu0 %1321
    %1324 = vst.msk [vmem:[#allocation2 + $0x10] sm:$0xff] %vm82, %v1322
    %v1325 = vsel %vm82, %v1322, 0
    %1327 = vmatprep.subr.mxu0 0.0
    %1328 = vmatpush1.msra.mxu0 %v43
    %1329 = vmatprep.subr.mxu0 0.0
    %1330 = vmatpush1.msra.mxu0 %v44
    %1331 = vmatprep.subr.mxu0 0.0
    %1332 = vmatpush1.msra.mxu0 %v45
    %1333 = vmatprep.subr.mxu0 0.0
    %1334 = vmatpush1.msra.mxu0 %v46
    %1335 = vmatprep.subr.mxu0 0.0
    %1336 = vmatpush1.msra.mxu0 0.0
    %1337 = vmatprep.subr.mxu0 0.0
    %1338 = vmatpush1.msra.mxu0 0.0
    %1339 = vmatprep.subr.mxu0 0.0
    %1340 = vmatpush1.msra.mxu0 0.0
    %1341 = vmatprep.subr.mxu0 0.0
    %1342 = vmatpush1.msra.mxu0 0.0
    %1343 = vmatprep.subr.mxu0 0.0
    %1344 = vmatpush1.msra.mxu0 0.0
    %1345 = vmatprep.subr.mxu0 0.0
    %1346 = vmatpush1.msra.mxu0 0.0
    %1347 = vmatprep.subr.mxu0 0.0
    %1348 = vmatpush1.msra.mxu0 0.0
    %1349 = vmatprep.subr.mxu0 0.0
    %1350 = vmatpush1.msra.mxu0 0.0
    %1351 = vmatprep.subr.mxu0 0.0
    %1352 = vmatpush1.msra.mxu0 0.0
    %1353 = vmatprep.subr.mxu0 0.0
    %1354 = vmatpush1.msra.mxu0 0.0
    %1355 = vmatprep.subr.mxu0 0.0
    %1356 = vmatpush1.msra.mxu0 0.0
    %1357 = vmatprep.subr.mxu0 0.0
    %1358 = vmatpush1.msra.mxu0 0.0
    %1359 = vmatprep.subr.mxu0 0.0
    %1360 = vmatpush1.msra.mxu0 0.0
    %1361 = vmatprep.subr.mxu0 0.0
    %1362 = vmatpush1.msra.mxu0 0.0
    %1363 = vmatprep.subr.mxu0 0.0
    %1364 = vmatpush1.msra.mxu0 0.0
    %1365 = vmatprep.subr.mxu0 0.0
    %1366 = vmatpush1.msra.mxu0 0.0
    %1367 = vmatprep.subr.mxu0 0.0
    %1368 = vmatpush1.msra.mxu0 0.0
    %1369 = vmatprep.subr.mxu0 0.0
    %1370 = vmatpush1.msra.mxu0 0.0
    %1371 = vmatprep.subr.mxu0 0.0
    %1372 = vmatpush1.msra.mxu0 0.0
    %1373 = vmatprep.subr.mxu0 0.0
    %1374 = vmatpush1.msra.mxu0 0.0
    %1375 = vmatprep.subr.mxu0 0.0
    %1376 = vmatpush1.msra.mxu0 0.0
    %1377 = vmatprep.subr.mxu0 0.0
    %1378 = vmatpush1.msra.mxu0 0.0
    %1379 = vmatprep.subr.mxu0 0.0
    %1380 = vmatpush1.msra.mxu0 0.0
    %1381 = vmatprep.subr.mxu0 0.0
    %1382 = vmatpush1.msra.mxu0 0.0
    %1383 = vmatprep.subr.mxu0 0.0
    %1384 = vmatpush1.msra.mxu0 0.0
    %1385 = vmatprep.subr.mxu0 0.0
    %1386 = vmatpush1.msra.mxu0 0.0
    %1387 = vmatprep.subr.mxu0 0.0
    %1388 = vmatpush1.msra.mxu0 0.0
    %1389 = vmatprep.subr.mxu0 0.0
    %1390 = vmatpush1.msra.mxu0 0.0
    %1391 = vmatprep.mubr.f32.mxu0 0.0
    %1392 = vmatmul.mubr.f32.gmra.mrb[0].mxu0 %v1325
    %v1393 = vpop.f32.mrb[0].mxu0
    %v1394 = vadd.f32 0.0, %v1393
    %v1395 = vpop.f32.mrb[0].mxu0
    %1396 = vdwg.mxu0
    %v1397 = vadd.f32 %v300, %v1394
    %v1398 = vxor.u32 %v1397, 2147483648
    %v1399 = vmul.f32 %v1398, 1.442695
    %v1400 = vpow.pop %v1399
    %v1401 = vadd.f32 %v1400, 1.0
    %v1402 = vrcp.pop %v1401
    %v1403 = vmul.f32 1.0, %v1402
    %v1404 = vtanh.pop %v1397
    %v1405 = vmul.f32 %v1403, %v1313
    %1407 = vrot.lane.b32.xlu0 %v1404, 64
    %v1408 = vpop.permute.xlu0 %1407
    %v1410 = vmul.f32 %v1403, %v1408
    %1412 = vrot.lane.b32.xlu0 %v1410, 32
    %v1413 = vpop.permute.xlu0 %1412
    %v1415 = vadd.f32 %v1405, %v1413
    %v1416 = vtanh.pop %v1415
    %1418 = vrot.lane.b32.xlu0 %v1416, 64
    %v1419 = vpop.permute.xlu0 %1418
    %v1421 = vmul.f32 %v1403, %v1419
    %1423 = vrot.lane.b32.xlu0 %v1421, 32
    %v1424 = vpop.permute.xlu0 %1423
    %1426 = vst.msk [vmem:[#allocation2 + $0x18] sm:$0xff] %vm82, %v1424
    %v1427 = vsel %vm82, %v1424, 0
    %1429 = vmatprep.subr.mxu0 0.0
    %1430 = vmatpush1.msra.mxu0 %v43
    %1431 = vmatprep.subr.mxu0 0.0
    %1432 = vmatpush1.msra.mxu0 %v44
    %1433 = vmatprep.subr.mxu0 0.0
    %1434 = vmatpush1.msra.mxu0 %v45
    %1435 = vmatprep.subr.mxu0 0.0
    %1436 = vmatpush1.msra.mxu0 %v46
    %1437 = vmatprep.subr.mxu0 0.0
    %1438 = vmatpush1.msra.mxu0 0.0
    %1439 = vmatprep.subr.mxu0 0.0
    %1440 = vmatpush1.msra.mxu0 0.0
    %1441 = vmatprep.subr.mxu0 0.0
    %1442 = vmatpush1.msra.mxu0 0.0
    %1443 = vmatprep.subr.mxu0 0.0
    %1444 = vmatpush1.msra.mxu0 0.0
    %1445 = vmatprep.subr.mxu0 0.0
    %1446 = vmatpush1.msra.mxu0 0.0
    %1447 = vmatprep.subr.mxu0 0.0
    %1448 = vmatpush1.msra.mxu0 0.0
    %1449 = vmatprep.subr.mxu0 0.0
    %1450 = vmatpush1.msra.mxu0 0.0
    %1451 = vmatprep.subr.mxu0 0.0
    %1452 = vmatpush1.msra.mxu0 0.0
    %1453 = vmatprep.subr.mxu0 0.0
    %1454 = vmatpush1.msra.mxu0 0.0
    %1455 = vmatprep.subr.mxu0 0.0
    %1456 = vmatpush1.msra.mxu0 0.0
    %1457 = vmatprep.subr.mxu0 0.0
    %1458 = vmatpush1.msra.mxu0 0.0
    %1459 = vmatprep.subr.mxu0 0.0
    %1460 = vmatpush1.msra.mxu0 0.0
    %1461 = vmatprep.subr.mxu0 0.0
    %1462 = vmatpush1.msra.mxu0 0.0
    %1463 = vmatprep.subr.mxu0 0.0
    %1464 = vmatpush1.msra.mxu0 0.0
    %1465 = vmatprep.subr.mxu0 0.0
    %1466 = vmatpush1.msra.mxu0 0.0
    %1467 = vmatprep.subr.mxu0 0.0
    %1468 = vmatpush1.msra.mxu0 0.0
    %1469 = vmatprep.subr.mxu0 0.0
    %1470 = vmatpush1.msra.mxu0 0.0
    %1471 = vmatprep.subr.mxu0 0.0
    %1472 = vmatpush1.msra.mxu0 0.0
    %1473 = vmatprep.subr.mxu0 0.0
    %1474 = vmatpush1.msra.mxu0 0.0
    %1475 = vmatprep.subr.mxu0 0.0
    %1476 = vmatpush1.msra.mxu0 0.0
    %1477 = vmatprep.subr.mxu0 0.0
    %1478 = vmatpush1.msra.mxu0 0.0
    %1479 = vmatprep.subr.mxu0 0.0
    %1480 = vmatpush1.msra.mxu0 0.0
    %1481 = vmatprep.subr.mxu0 0.0
    %1482 = vmatpush1.msra.mxu0 0.0
    %1483 = vmatprep.subr.mxu0 0.0
    %1484 = vmatpush1.msra.mxu0 0.0
    %1485 = vmatprep.subr.mxu0 0.0
    %1486 = vmatpush1.msra.mxu0 0.0
    %1487 = vmatprep.subr.mxu0 0.0
    %1488 = vmatpush1.msra.mxu0 0.0
    %1489 = vmatprep.subr.mxu0 0.0
    %1490 = vmatpush1.msra.mxu0 0.0
    %1491 = vmatprep.subr.mxu0 0.0
    %1492 = vmatpush1.msra.mxu0 0.0
    %1493 = vmatprep.mubr.f32.mxu0 0.0
    %1494 = vmatmul.mubr.f32.gmra.mrb[0].mxu0 %v1427
    %v1495 = vpop.f32.mrb[0].mxu0
    %v1496 = vadd.f32 0.0, %v1495
    %v1497 = vpop.f32.mrb[0].mxu0
    %1498 = vdwg.mxu0
    %v1499 = vadd.f32 %v305, %v1496
    %v1500 = vxor.u32 %v1499, 2147483648
    %v1501 = vmul.f32 %v1500, 1.442695
    %v1502 = vpow.pop %v1501
    %v1503 = vadd.f32 %v1502, 1.0
    %v1504 = vrcp.pop %v1503
    %v1505 = vmul.f32 1.0, %v1504
    %v1506 = vtanh.pop %v1499
    %v1507 = vmul.f32 %v1505, %v1415
    %1509 = vrot.lane.b32.xlu0 %v1506, 64
    %v1510 = vpop.permute.xlu0 %1509
    %v1512 = vmul.f32 %v1505, %v1510
    %1514 = vrot.lane.b32.xlu0 %v1512, 32
    %v1515 = vpop.permute.xlu0 %1514
    %v1517 = vadd.f32 %v1507, %v1515
    %v1518 = vtanh.pop %v1517
    %1520 = vrot.lane.b32.xlu0 %v1518, 64
    %v1521 = vpop.permute.xlu0 %1520
    %v1523 = vmul.f32 %v1505, %v1521
    %1525 = vrot.lane.b32.xlu0 %v1523, 32
    %v1526 = vpop.permute.xlu0 %1525
    %1528 = vst.msk [vmem:[#allocation2 + $0x20] sm:$0xff] %vm82, %v1526
    %v1529 = vsel %vm82, %v1526, 0
    %1531 = vmatprep.subr.mxu0 0.0
    %1532 = vmatpush1.msra.mxu0 %v43
    %1533 = vmatprep.subr.mxu0 0.0
    %1534 = vmatpush1.msra.mxu0 %v44
    %1535 = vmatprep.subr.mxu0 0.0
    %1536 = vmatpush1.msra.mxu0 %v45
    %1537 = vmatprep.subr.mxu0 0.0
    %1538 = vmatpush1.msra.mxu0 %v46
    %1539 = vmatprep.subr.mxu0 0.0
    %1540 = vmatpush1.msra.mxu0 0.0
    %1541 = vmatprep.subr.mxu0 0.0
    %1542 = vmatpush1.msra.mxu0 0.0
    %1543 = vmatprep.subr.mxu0 0.0
    %1544 = vmatpush1.msra.mxu0 0.0
    %1545 = vmatprep.subr.mxu0 0.0
    %1546 = vmatpush1.msra.mxu0 0.0
    %1547 = vmatprep.subr.mxu0 0.0
    %1548 = vmatpush1.msra.mxu0 0.0
    %1549 = vmatprep.subr.mxu0 0.0
    %1550 = vmatpush1.msra.mxu0 0.0
    %1551 = vmatprep.subr.mxu0 0.0
    %1552 = vmatpush1.msra.mxu0 0.0
    %1553 = vmatprep.subr.mxu0 0.0
    %1554 = vmatpush1.msra.mxu0 0.0
    %1555 = vmatprep.subr.mxu0 0.0
    %1556 = vmatpush1.msra.mxu0 0.0
    %1557 = vmatprep.subr.mxu0 0.0
    %1558 = vmatpush1.msra.mxu0 0.0
    %1559 = vmatprep.subr.mxu0 0.0
    %1560 = vmatpush1.msra.mxu0 0.0
    %1561 = vmatprep.subr.mxu0 0.0
    %1562 = vmatpush1.msra.mxu0 0.0
    %1563 = vmatprep.subr.mxu0 0.0
    %1564 = vmatpush1.msra.mxu0 0.0
    %1565 = vmatprep.subr.mxu0 0.0
    %1566 = vmatpush1.msra.mxu0 0.0
    %1567 = vmatprep.subr.mxu0 0.0
    %1568 = vmatpush1.msra.mxu0 0.0
    %1569 = vmatprep.subr.mxu0 0.0
    %1570 = vmatpush1.msra.mxu0 0.0
    %1571 = vmatprep.subr.mxu0 0.0
    %1572 = vmatpush1.msra.mxu0 0.0
    %1573 = vmatprep.subr.mxu0 0.0
    %1574 = vmatpush1.msra.mxu0 0.0
    %1575 = vmatprep.subr.mxu0 0.0
    %1576 = vmatpush1.msra.mxu0 0.0
    %1577 = vmatprep.subr.mxu0 0.0
    %1578 = vmatpush1.msra.mxu0 0.0
    %1579 = vmatprep.subr.mxu0 0.0
    %1580 = vmatpush1.msra.mxu0 0.0
    %1581 = vmatprep.subr.mxu0 0.0
    %1582 = vmatpush1.msra.mxu0 0.0
    %1583 = vmatprep.subr.mxu0 0.0
    %1584 = vmatpush1.msra.mxu0 0.0
    %1585 = vmatprep.subr.mxu0 0.0
    %1586 = vmatpush1.msra.mxu0 0.0
    %1587 = vmatprep.subr.mxu0 0.0
    %1588 = vmatpush1.msra.mxu0 0.0
    %1589 = vmatprep.subr.mxu0 0.0
    %1590 = vmatpush1.msra.mxu0 0.0
    %1591 = vmatprep.subr.mxu0 0.0
    %1592 = vmatpush1.msra.mxu0 0.0
    %1593 = vmatprep.subr.mxu0 0.0
    %1594 = vmatpush1.msra.mxu0 0.0
    %1595 = vmatprep.mubr.f32.mxu0 0.0
    %1596 = vmatmul.mubr.f32.gmra.mrb[0].mxu0 %v1529
    %v1597 = vpop.f32.mrb[0].mxu0
    %v1598 = vadd.f32 0.0, %v1597
    %v1599 = vpop.f32.mrb[0].mxu0
    %1600 = vdwg.mxu0
    %v1601 = vadd.f32 %v310, %v1598
    %v1602 = vxor.u32 %v1601, 2147483648
    %v1603 = vmul.f32 %v1602, 1.442695
    %v1604 = vpow.pop %v1603
    %v1605 = vadd.f32 %v1604, 1.0
    %v1606 = vrcp.pop %v1605
    %v1607 = vmul.f32 1.0, %v1606
    %v1608 = vtanh.pop %v1601
    %v1609 = vmul.f32 %v1607, %v1517
    %1611 = vrot.lane.b32.xlu0 %v1608, 64
    %v1612 = vpop.permute.xlu0 %1611
    %v1614 = vmul.f32 %v1607, %v1612
    %1616 = vrot.lane.b32.xlu0 %v1614, 32
    %v1617 = vpop.permute.xlu0 %1616
    %v1619 = vadd.f32 %v1609, %v1617
    %v1620 = vtanh.pop %v1619
    %1622 = vrot.lane.b32.xlu0 %v1620, 64
    %v1623 = vpop.permute.xlu0 %1622
    %v1625 = vmul.f32 %v1607, %v1623
    %1627 = vrot.lane.b32.xlu0 %v1625, 32
    %v1628 = vpop.permute.xlu0 %1627
    %1630 = vst.msk [vmem:[#allocation2 + $0x28] sm:$0xff] %vm82, %v1628
    %v1631 = vsel %vm82, %v1628, 0
    %1633 = vmatprep.subr.mxu0 0.0
    %1634 = vmatpush1.msra.mxu0 %v43
    %1635 = vmatprep.subr.mxu0 0.0
    %1636 = vmatpush1.msra.mxu0 %v44
    %1637 = vmatprep.subr.mxu0 0.0
    %1638 = vmatpush1.msra.mxu0 %v45
    %1639 = vmatprep.subr.mxu0 0.0
    %1640 = vmatpush1.msra.mxu0 %v46
    %1641 = vmatprep.subr.mxu0 0.0
    %1642 = vmatpush1.msra.mxu0 0.0
    %1643 = vmatprep.subr.mxu0 0.0
    %1644 = vmatpush1.msra.mxu0 0.0
    %1645 = vmatprep.subr.mxu0 0.0
    %1646 = vmatpush1.msra.mxu0 0.0
    %1647 = vmatprep.subr.mxu0 0.0
    %1648 = vmatpush1.msra.mxu0 0.0
    %1649 = vmatprep.subr.mxu0 0.0
    %1650 = vmatpush1.msra.mxu0 0.0
    %1651 = vmatprep.subr.mxu0 0.0
    %1652 = vmatpush1.msra.mxu0 0.0
    %1653 = vmatprep.subr.mxu0 0.0
    %1654 = vmatpush1.msra.mxu0 0.0
    %1655 = vmatprep.subr.mxu0 0.0
    %1656 = vmatpush1.msra.mxu0 0.0
    %1657 = vmatprep.subr.mxu0 0.0
    %1658 = vmatpush1.msra.mxu0 0.0
    %1659 = vmatprep.subr.mxu0 0.0
    %1660 = vmatpush1.msra.mxu0 0.0
    %1661 = vmatprep.subr.mxu0 0.0
    %1662 = vmatpush1.msra.mxu0 0.0
    %1663 = vmatprep.subr.mxu0 0.0
    %1664 = vmatpush1.msra.mxu0 0.0
    %1665 = vmatprep.subr.mxu0 0.0
    %1666 = vmatpush1.msra.mxu0 0.0
    %1667 = vmatprep.subr.mxu0 0.0
    %1668 = vmatpush1.msra.mxu0 0.0
    %1669 = vmatprep.subr.mxu0 0.0
    %1670 = vmatpush1.msra.mxu0 0.0
    %1671 = vmatprep.subr.mxu0 0.0
    %1672 = vmatpush1.msra.mxu0 0.0
    %1673 = vmatprep.subr.mxu0 0.0
    %1674 = vmatpush1.msra.mxu0 0.0
    %1675 = vmatprep.subr.mxu0 0.0
    %1676 = vmatpush1.msra.mxu0 0.0
    %1677 = vmatprep.subr.mxu0 0.0
    %1678 = vmatpush1.msra.mxu0 0.0
    %1679 = vmatprep.subr.mxu0 0.0
    %1680 = vmatpush1.msra.mxu0 0.0
    %1681 = vmatprep.subr.mxu0 0.0
    %1682 = vmatpush1.msra.mxu0 0.0
    %1683 = vmatprep.subr.mxu0 0.0
    %1684 = vmatpush1.msra.mxu0 0.0
    %1685 = vmatprep.subr.mxu0 0.0
    %1686 = vmatpush1.msra.mxu0 0.0
    %1687 = vmatprep.subr.mxu0 0.0
    %1688 = vmatpush1.msra.mxu0 0.0
    %1689 = vmatprep.subr.mxu0 0.0
    %1690 = vmatpush1.msra.mxu0 0.0
    %1691 = vmatprep.subr.mxu0 0.0
    %1692 = vmatpush1.msra.mxu0 0.0
    %1693 = vmatprep.subr.mxu0 0.0
    %1694 = vmatpush1.msra.mxu0 0.0
    %1695 = vmatprep.subr.mxu0 0.0
    %1696 = vmatpush1.msra.mxu0 0.0
    %1697 = vmatprep.mubr.f32.mxu0 0.0
    %1698 = vmatmul.mubr.f32.gmra.mrb[0].mxu0 %v1631
    %v1699 = vpop.f32.mrb[0].mxu0
    %v1700 = vadd.f32 0.0, %v1699
    %v1701 = vpop.f32.mrb[0].mxu0
    %1702 = vdwg.mxu0
    %v1703 = vadd.f32 %v315, %v1700
    %v1704 = vxor.u32 %v1703, 2147483648
    %v1705 = vmul.f32 %v1704, 1.442695
    %v1706 = vpow.pop %v1705
    %v1707 = vadd.f32 %v1706, 1.0
    %v1708 = vrcp.pop %v1707
    %v1709 = vmul.f32 1.0, %v1708
    %v1710 = vtanh.pop %v1703
    %v1711 = vmul.f32 %v1709, %v1619
    %1713 = vrot.lane.b32.xlu0 %v1710, 64
    %v1714 = vpop.permute.xlu0 %1713
    %v1716 = vmul.f32 %v1709, %v1714
    %1718 = vrot.lane.b32.xlu0 %v1716, 32
    %v1719 = vpop.permute.xlu0 %1718
    %v1721 = vadd.f32 %v1711, %v1719
    %v1722 = vtanh.pop %v1721
    %1724 = vrot.lane.b32.xlu0 %v1722, 64
    %v1725 = vpop.permute.xlu0 %1724
    %v1727 = vmul.f32 %v1709, %v1725
    %1729 = vrot.lane.b32.xlu0 %v1727, 32
    %v1730 = vpop.permute.xlu0 %1729
    %1732 = vst.msk [vmem:[#allocation2 + $0x30] sm:$0xff] %vm82, %v1730
    %v1733 = vld [vmem:[#allocation2] sm:$0xff]
    %v1734 = vld [vmem:[#allocation2 + $0x8] sm:$0xff]
    %v1735 = vld [vmem:[#allocation2 + $0x10] sm:$0xff]
    %v1736 = vld [vmem:[#allocation2 + $0x18] sm:$0xff]
    %v1737 = vld [vmem:[#allocation2 + $0x20] sm:$0xff]
    %v1738 = vld [vmem:[#allocation2 + $0x28] sm:$0xff]
    %v1739 = vld [vmem:[#allocation2 + $0x30] sm:$0xff]
    %v1740 = vld [vmem:[%s9] sm:$0xff]
    %v1741 = vld [vmem:[%s9 + $0x8] sm:$0xff]
    %v1742 = vld [vmem:[%s9 + $0x10] sm:$0xff]
    %v1743 = vld [vmem:[%s9 + $0x18] sm:$0xff]
    %v1744 = vld [vmem:[%s10] sm:$0x1]
    %v1746 = vlaneseq
    %v1747 = vshrl.u32 %v1746, 7
    %v1748 = vsub.s32 0, %v1747
    %v1749 = vrot.slane %v1744, %v1748
    %v1752 = vsel %vm82, %v1733, 0
    %v1755 = vsel %vm82, %v1734, 0
    %v1758 = vsel %vm82, %v1735, 0
    %v1761 = vsel %vm82, %v1736, 0
    %v1764 = vsel %vm82, %v1737, 0
    %v1767 = vsel %vm82, %v1738, 0
    %v1770 = vsel %vm82, %v1739, 0
    %1772 = vmatprep.subr.mxu0 0.0
    %1773 = vmatpush1.msra.mxu0 %v1740
    %1774 = vmatprep.subr.mxu0 0.0
    %1775 = vmatpush1.msra.mxu0 %v1741
    %1776 = vmatprep.subr.mxu0 0.0
    %1777 = vmatpush1.msra.mxu0 %v1742
    %1778 = vmatprep.subr.mxu0 0.0
    %1779 = vmatpush1.msra.mxu0 %v1743
    %1780 = vmatprep.subr.mxu0 0.0
    %1781 = vmatpush1.msra.mxu0 0.0
    %1782 = vmatprep.subr.mxu0 0.0
    %1783 = vmatpush1.msra.mxu0 0.0
    %1784 = vmatprep.subr.mxu0 0.0
    %1785 = vmatpush1.msra.mxu0 0.0
    %1786 = vmatprep.subr.mxu0 0.0
    %1787 = vmatpush1.msra.mxu0 0.0
    %1788 = vmatprep.subr.mxu0 0.0
    %1789 = vmatpush1.msra.mxu0 0.0
    %1790 = vmatprep.subr.mxu0 0.0
    %1791 = vmatpush1.msra.mxu0 0.0
    %1792 = vmatprep.subr.mxu0 0.0
    %1793 = vmatpush1.msra.mxu0 0.0
    %1794 = vmatprep.subr.mxu0 0.0
    %1795 = vmatpush1.msra.mxu0 0.0
    %1796 = vmatprep.subr.mxu0 0.0
    %1797 = vmatpush1.msra.mxu0 0.0
    %1798 = vmatprep.subr.mxu0 0.0
    %1799 = vmatpush1.msra.mxu0 0.0
    %1800 = vmatprep.subr.mxu0 0.0
    %1801 = vmatpush1.msra.mxu0 0.0
    %1802 = vmatprep.subr.mxu0 0.0
    %1803 = vmatpush1.msra.mxu0 0.0
    %1804 = vmatprep.subr.mxu0 0.0
    %1805 = vmatpush1.msra.mxu0 0.0
    %1806 = vmatprep.subr.mxu0 0.0
    %1807 = vmatpush1.msra.mxu0 0.0
    %1808 = vmatprep.subr.mxu0 0.0
    %1809 = vmatpush1.msra.mxu0 0.0
    %1810 = vmatprep.subr.mxu0 0.0
    %1811 = vmatpush1.msra.mxu0 0.0
    %1812 = vmatprep.subr.mxu0 0.0
    %1813 = vmatpush1.msra.mxu0 0.0
    %1814 = vmatprep.subr.mxu0 0.0
    %1815 = vmatpush1.msra.mxu0 0.0
    %1816 = vmatprep.subr.mxu0 0.0
    %1817 = vmatpush1.msra.mxu0 0.0
    %1818 = vmatprep.subr.mxu0 0.0
    %1819 = vmatpush1.msra.mxu0 0.0
    %1820 = vmatprep.subr.mxu0 0.0
    %1821 = vmatpush1.msra.mxu0 0.0
    %1822 = vmatprep.subr.mxu0 0.0
    %1823 = vmatpush1.msra.mxu0 0.0
    %1824 = vmatprep.subr.mxu0 0.0
    %1825 = vmatpush1.msra.mxu0 0.0
    %1826 = vmatprep.subr.mxu0 0.0
    %1827 = vmatpush1.msra.mxu0 0.0
    %1828 = vmatprep.subr.mxu0 0.0
    %1829 = vmatpush1.msra.mxu0 0.0
    %1830 = vmatprep.subr.mxu0 0.0
    %1831 = vmatpush1.msra.mxu0 0.0
    %1832 = vmatprep.subr.mxu0 0.0
    %1833 = vmatpush1.msra.mxu0 0.0
    %1834 = vmatprep.subr.mxu0 0.0
    %1835 = vmatpush1.msra.mxu0 0.0
    %1836 = vmatprep.mubr.f32.mxu0 0.0
    %1837 = vmatmul.mubr.f32.gmra.mrb[0].mxu0 %v1752
    %v1838 = vpop.f32.mrb[0].mxu0
    %v1839 = vadd.f32 %v1749, %v1838
    %v1840 = vpop.f32.mrb[0].mxu0
    %1841 = vmatprep.mubr.f32.mxu0 0.0
    %1842 = vmatmul.mubr.f32.gmra.mrb[0].mxu0 %v1755
    %v1843 = vpop.f32.mrb[0].mxu0
    %v1844 = vadd.f32 %v1749, %v1843
    %v1845 = vpop.f32.mrb[0].mxu0
    %1846 = vmatprep.mubr.f32.mxu0 0.0
    %1847 = vmatmul.mubr.f32.gmra.mrb[0].mxu0 %v1758
    %v1848 = vpop.f32.mrb[0].mxu0
    %v1849 = vadd.f32 %v1749, %v1848
    %v1850 = vpop.f32.mrb[0].mxu0
    %1851 = vmatprep.mubr.f32.mxu0 0.0
    %1852 = vmatmul.mubr.f32.gmra.mrb[0].mxu0 %v1761
    %v1853 = vpop.f32.mrb[0].mxu0
    %v1854 = vadd.f32 %v1749, %v1853
    %v1855 = vpop.f32.mrb[0].mxu0
    %1856 = vmatprep.mubr.f32.mxu0 0.0
    %1857 = vmatmul.mubr.f32.gmra.mrb[0].mxu0 %v1764
    %v1858 = vpop.f32.mrb[0].mxu0
    %v1859 = vadd.f32 %v1749, %v1858
    %v1860 = vpop.f32.mrb[0].mxu0
    %1861 = vmatprep.mubr.f32.mxu0 0.0
    %1862 = vmatmul.mubr.f32.gmra.mrb[0].mxu0 %v1767
    %v1863 = vpop.f32.mrb[0].mxu0
    %v1864 = vadd.f32 %v1749, %v1863
    %v1865 = vpop.f32.mrb[0].mxu0
    %1866 = vmatprep.mubr.f32.mxu0 0.0
    %1867 = vmatmul.mubr.f32.gmra.mrb[0].mxu0 %v1770
    %v1868 = vpop.f32.mrb[0].mxu0
    %v1869 = vadd.f32 %v1749, %v1868
    %v1870 = vpop.f32.mrb[0].mxu0
    %1871 = vdwg.mxu0
    %v1872 = vsel %vm82, %v1839, -inf
    %1873 = vmax.xlane.f32.xlu0 %v1872
    %v1874 = vpop.xlane.xlu0 %1873
    %v1875 = vsel %vm82, %v1844, -inf
    %1876 = vmax.xlane.f32.xlu0 %v1875
    %v1877 = vpop.xlane.xlu0 %1876
    %v1878 = vsel %vm82, %v1849, -inf
    %1879 = vmax.xlane.f32.xlu0 %v1878
    %v1880 = vpop.xlane.xlu0 %1879
    %v1881 = vsel %vm82, %v1854, -inf
    %1882 = vmax.xlane.f32.xlu0 %v1881
    %v1883 = vpop.xlane.xlu0 %1882
    %v1884 = vsel %vm82, %v1859, -inf
    %1885 = vmax.xlane.f32.xlu0 %v1884
    %v1886 = vpop.xlane.xlu0 %1885
    %v1887 = vsel %vm82, %v1864, -inf
    %1888 = vmax.xlane.f32.xlu0 %v1887
    %v1889 = vpop.xlane.xlu0 %1888
    %v1890 = vsel %vm82, %v1869, -inf
    %1891 = vmax.xlane.f32.xlu0 %v1890
    %v1892 = vpop.xlane.xlu0 %1891
    %v1893 = vsub.f32 %v1839, %v1874
    %v1894 = vsub.f32 %v1844, %v1877
    %v1895 = vsub.f32 %v1849, %v1880
    %v1896 = vsub.f32 %v1854, %v1883
    %v1897 = vsub.f32 %v1859, %v1886
    %v1898 = vsub.f32 %v1864, %v1889
    %v1899 = vsub.f32 %v1869, %v1892
    %v1900 = vmul.f32 %v1893, 1.442695
    %v1901 = vpow.pop %v1900
    %v1902 = vmul.f32 %v1894, 1.442695
    %v1903 = vpow.pop %v1902
    %v1904 = vmul.f32 %v1895, 1.442695
    %v1905 = vpow.pop %v1904
    %v1906 = vmul.f32 %v1896, 1.442695
    %v1907 = vpow.pop %v1906
    %v1908 = vmul.f32 %v1897, 1.442695
    %v1909 = vpow.pop %v1908
    %v1910 = vmul.f32 %v1898, 1.442695
    %v1911 = vpow.pop %v1910
    %v1912 = vmul.f32 %v1899, 1.442695
    %v1913 = vpow.pop %v1912
    %v1914 = vsel %vm82, %v1901, 0.0
    %1915 = vadd.xlane.f32.xlu0 %v1914
    %v1916 = vpop.xlane.xlu0 %1915
    %v1917 = vsel %vm82, %v1903, 0.0
    %1918 = vadd.xlane.f32.xlu0 %v1917
    %v1919 = vpop.xlane.xlu0 %1918
    %v1920 = vsel %vm82, %v1905, 0.0
    %1921 = vadd.xlane.f32.xlu0 %v1920
    %v1922 = vpop.xlane.xlu0 %1921
    %v1923 = vsel %vm82, %v1907, 0.0
    %1924 = vadd.xlane.f32.xlu0 %v1923
    %v1925 = vpop.xlane.xlu0 %1924
    %v1926 = vsel %vm82, %v1909, 0.0
    %1927 = vadd.xlane.f32.xlu0 %v1926
    %v1928 = vpop.xlane.xlu0 %1927
    %v1929 = vsel %vm82, %v1911, 0.0
    %1930 = vadd.xlane.f32.xlu0 %v1929
    %v1931 = vpop.xlane.xlu0 %1930
    %v1932 = vsel %vm82, %v1913, 0.0
    %1933 = vadd.xlane.f32.xlu0 %v1932
    %v1934 = vpop.xlane.xlu0 %1933
    %v1935 = vlog2.pop %v1916
    %v1936 = vmul.f32 %v1935, 0.6931472
    %v1937 = vlog2.pop %v1919
    %v1938 = vmul.f32 %v1937, 0.6931472
    %v1939 = vlog2.pop %v1922
    %v1940 = vmul.f32 %v1939, 0.6931472
    %v1941 = vlog2.pop %v1925
    %v1942 = vmul.f32 %v1941, 0.6931472
    %v1943 = vlog2.pop %v1928
    %v1944 = vmul.f32 %v1943, 0.6931472
    %v1945 = vlog2.pop %v1931
    %v1946 = vmul.f32 %v1945, 0.6931472
    %v1947 = vlog2.pop %v1934
    %v1948 = vmul.f32 %v1947, 0.6931472
    %v1949 = vadd.f32 %v1874, %v1936
    %v1950 = vadd.f32 %v1877, %v1938
    %v1951 = vadd.f32 %v1880, %v1940
    %v1952 = vadd.f32 %v1883, %v1942
    %v1953 = vadd.f32 %v1886, %v1944
    %v1954 = vadd.f32 %v1889, %v1946
    %v1955 = vadd.f32 %v1892, %v1948
    %v1956 = vmul.f32 %v1839, %v56
    %v1957 = vmul.f32 %v1844, %v57
    %v1958 = vmul.f32 %v1849, %v58
    %v1959 = vmul.f32 %v1854, %v59
    %v1960 = vmul.f32 %v1859, %v60
    %v1961 = vmul.f32 %v1864, %v61
    %v1962 = vmul.f32 %v1869, %v62
    %v1963 = vsel %vm82, %v1956, 0.0
    %1964 = vadd.xlane.f32.xlu0 %v1963
    %v1965 = vpop.xlane.xlu0 %1964
    %v1966 = vsel %vm82, %v1957, 0.0
    %1967 = vadd.xlane.f32.xlu0 %v1966
    %v1968 = vpop.xlane.xlu0 %1967
    %v1969 = vsel %vm82, %v1958, 0.0
    %1970 = vadd.xlane.f32.xlu0 %v1969
    %v1971 = vpop.xlane.xlu0 %1970
    %v1972 = vsel %vm82, %v1959, 0.0
    %1973 = vadd.xlane.f32.xlu0 %v1972
    %v1974 = vpop.xlane.xlu0 %1973
    %v1975 = vsel %vm82, %v1960, 0.0
    %1976 = vadd.xlane.f32.xlu0 %v1975
    %v1977 = vpop.xlane.xlu0 %1976
    %v1978 = vsel %vm82, %v1961, 0.0
    %1979 = vadd.xlane.f32.xlu0 %v1978
    %v1980 = vpop.xlane.xlu0 %1979
    %v1981 = vsel %vm82, %v1962, 0.0
    %1982 = vadd.xlane.f32.xlu0 %v1981
    %v1983 = vpop.xlane.xlu0 %1982
    %v1984 = vsub.f32 %v1949, %v1965
    %v1985 = vsub.f32 %v1950, %v1968
    %v1986 = vsub.f32 %v1951, %v1971
    %v1987 = vsub.f32 %v1952, %v1974
    %v1988 = vsub.f32 %v1953, %v1977
    %v1989 = vsub.f32 %v1954, %v1980
    %v1990 = vsub.f32 %v1955, %v1983
    %v1991 = vmul.f32 %v1984, %v64
    %v1992 = vmul.f32 %v1985, %v65
    %v1993 = vmul.f32 %v1986, %v66
    %v1994 = vmul.f32 %v1987, %v67
    %v1995 = vmul.f32 %v1988, %v68
    %v1996 = vmul.f32 %v1989, %v69
    %v1997 = vmul.f32 %v1990, %v70
    %vm1998 = vcmask 7168
    %v1999 = vsel %vm1998, %v1991, 0.0
    %v2000 = vsel %vm1998, %v1992, 0.0
    %v2001 = vadd.f32 %v1999, %v2000
    %v2002 = vsel %vm1998, %v1993, 0.0
    %v2003 = vadd.f32 %v2001, %v2002
    %v2004 = vsel %vm1998, %v1994, 0.0
    %v2005 = vadd.f32 %v2003, %v2004
    %v2006 = vsel %vm1998, %v1995, 0.0
    %v2007 = vadd.f32 %v2005, %v2006
    %v2008 = vsel %vm1998, %v1996, 0.0
    %v2009 = vadd.f32 %v2007, %v2008
    %v2010 = vsel %vm1998, %v1997, 0.0
    %v2011 = vadd.f32 %v2009, %v2010
    %2012 = vadd.xlane.f32.xlu0 %v2011
    %v2013 = vpop.xlane.xlu0 %2012
    %v2014 = vrot.slane %v2013, 4
    %v2015 = vadd.f32 %v2013, %v2014
    %v2016 = vrot.slane %v2015, 2
    %v2017 = vadd.f32 %v2015, %v2016
    %v2018 = vrot.slane %v2017, 1
    %v2019 = vadd.f32 %v2017, %v2018
    %s2020 = vtos %v2019
    %v2021 = vsel %vm82, %v47, -inf
    %2022 = vmax.xlane.f32.xlu0 %v2021
    %v2023 = vpop.xlane.xlu0 %2022
    %v2024 = vsub.f32 %v47, %v2023
    %v2025 = vmul.f32 %v2024, 1.442695
    %v2026 = vpow.pop %v2025
    %v2027 = vsel %vm82, %v2026, 0.0
    %2028 = vadd.xlane.f32.xlu0 %v2027
    %v2029 = vpop.xlane.xlu0 %2028
    %v2030 = vlog2.pop %v2029
    %v2031 = vmul.f32 %v2030, 0.6931472
    %v2032 = vadd.f32 %v2023, %v2031
    %v2033 = vmul.f32 %v47, %v55
    %v2034 = vsel %vm82, %v2033, 0.0
    %2035 = vadd.xlane.f32.xlu0 %v2034
    %v2036 = vpop.xlane.xlu0 %2035
    %v2037 = vsub.f32 %v2032, %v2036
    %v2038 = vmul.f32 %v2037, %v63
    %v2039 = vsel %vm1998, %v2038, 0.0
    %2040 = vadd.xlane.f32.xlu0 %v2039
    %v2041 = vpop.xlane.xlu0 %2040
    %v2042 = vrot.slane %v2041, 4
    %v2043 = vadd.f32 %v2041, %v2042
    %v2044 = vrot.slane %v2043, 2
    %v2045 = vadd.f32 %v2043, %v2044
    %v2046 = vrot.slane %v2045, 1
    %v2047 = vadd.f32 %v2045, %v2046
    %s2048 = vtos %v2047
    %s2049 = sadd.f32 %s2020, %s2048
    %v2050 = vstv %s2049
    %2051 = vst [vmem:[#allocation3] sm:$0xff] %v2050
    // Predicated region
    $region46: #{tpu_custom_call.1} parent=1 // pred_check
      _
    $region47: #{tpu_custom_call.1} parent=1 // pred_check_branch
      %2053 = sbr.rel (0) target = $region49
    $region48: #{tpu_custom_call.1} parent=1 // pred_region
      %s2055 = ssub.s32 128, 128
      %2056 = vsyncadd [#allocation4], %s2055
      %s2058 = sshll.u32 [#allocation3], 4
      %s2059 = int_to_ptr.vmem [resolvable:$true] %s2058
      %2061 = dma.vmem_to_hbm [thread:$0]  %s2059, 128, %s11, [#allocation4]
    $region49: #{tpu_custom_call.1} parent=1 // pred_fallthru
      _
    // Predicated region
    $region50: #{tpu_custom_call.1} parent=1 // pred_check
      _
    $region51: #{tpu_custom_call.1} parent=1 // pred_check_branch
      %2063 = sbr.rel (0) target = $region53
    $region52: #{tpu_custom_call.1} parent=1 // pred_region
      %2064 = dma.done [#allocation4], 128
    $region53: #{tpu_custom_call.1} parent=1 // pred_fallthru
      _
    %2065 = vsyncpa [#allocation4], 1

</llo_original>
